<compile_context>
chip_gen: v5e
topology: v5e:2x2
jax: 0.10.0
libtpu: 0.0.40
codegen_flags: <defaults>
</compile_context>

<pallas_src>
import functools

import jax
import jax.numpy as jnp
from jax.experimental import pallas as pl
from jax.experimental.pallas import tpu as pltpu


# ---------------------------------------------------------------------------
# Generation-aware VMEM budget.
# ---------------------------------------------------------------------------
@functools.lru_cache(maxsize=None)
def _device_kind():
    try:
        return jax.devices()[0].device_kind.lower()
    except Exception:
        return ""


@functools.lru_cache(maxsize=None)
def _is_v7x():
    # v7x ("TPU7x") is the only 2-TensorCore / 64-MiB-VMEM part we care about.
    return "7" in _device_kind()


@functools.lru_cache(maxsize=None)
def _vmem_capacity_bytes():
    cap = None
    try:
        info = pltpu.get_tpu_info()
        for name in ("vmem_capacity_bytes", "vmem_size_bytes", "vmem_bytes"):
            val = getattr(info, name, None)
            if val:
                cap = int(val)
                break
    except Exception:
        cap = None
    if cap is None:
        kind = _device_kind()
        if ("v5" in kind) or ("v6" in kind):
            cap = 128 << 20          # v5e / v6e: 128 MiB
        else:
            cap = 64 << 20           # v7x (per TC) and unknown parts
    if _is_v7x():
        cap = min(cap, 64 << 20)     # per-TensorCore VMEM on v7x
    return cap


def _vmem_limit_bytes():
    # ~96 MiB on 128-MiB parts, ~48 MiB on v7x.
    return (_vmem_capacity_bytes() * 3) // 4


# ---------------------------------------------------------------------------
# Tile selection.
# ---------------------------------------------------------------------------
def _tile_candidates(dim):
    """Valid block sizes for `dim`: the full dim, plus every divisor that is a
    multiple of 128 (respects the (8, 128) layout constraint)."""
    cands = [dim]
    if dim % 128 == 0:
        t = dim - 128
        while t >= 128:
            if dim % t == 0:
                cands.append(t)
            t -= 128
    return cands  # descending


def _pick_tiles(K, N, itemsize, wbudget, nbuf):
    """Pick (tk, tn) weight-tile sizes for the buffer count actually used.

    HBM weight-streaming bound: maximise the weight panel (fewest grid steps)
    subject to `nbuf` pipeline copies fitting the VMEM weight budget; prefer an
    even N-tile count (v7x 2-TC balance); prefer collapsing the K axis (no
    reduction bookkeeping); prefer wide, lane-dense output tiles.
    """
    best = None
    for tn in _tile_candidates(N):
        n_n = N // tn
        for tk in _tile_candidates(K):
            n_k = K // tk
            if nbuf * tk * tn * itemsize > wbudget:
                continue
            rank = (n_n % 2 != 0, n_n * n_k, n_k, -tn)
            if best is None or rank < best[0]:
                best = (rank, tk, tn)
    if best is None:  # shouldn't happen for this model; fall back to tiny tiles
        return _tile_candidates(K)[-1], _tile_candidates(N)[-1]
    return best[1], best[2]


# ---------------------------------------------------------------------------
# Kernels.
# ---------------------------------------------------------------------------
def _apply_act(z, act):
    if act == "relu":
        return jnp.maximum(z, 0.0)
    if act == "gelu":
        # exact (erf) GELU, matching torch.nn.GELU() default
        return 0.5 * z * (1.0 + jax.lax.erf(z * 0.7071067811865476))
    return z


def _epilogue(z, b, scale, act, out_dtype):
    if scale != 1.0:           # static Python check: no-op mul is never emitted
        z = z * scale
    z = z + b
    return _apply_act(z, act).astype(out_dtype)


def _linear_simple_kernel(x_ref, w_ref, b_ref, o_ref, *, scale, act):
    # Single pass over K: whole-X @ weight-panel, epilogue fused.
    x = x_ref[...]
    w = w_ref[...]
    if x.dtype != w.dtype:
        x = x.astype(w.dtype)          # bf16 matmul operands, f32 accumulation
    z = jnp.dot(x, w, preferred_element_type=jnp.float32)
    o_ref[...] = _epilogue(z, b_ref[...], scale, act, o_ref.dtype)


def _linear_acc_kernel(x_ref, w_ref, b_ref, o_ref, acc_ref, *, scale, act):
    # K is tiled: the BlockSpec delivers the matching X K-slice (no in-kernel
    # dynamic slicing), accumulate in f32 scratch, epilogue on the last step.
    k = pl.program_id(1)

    @pl.when(k == 0)
    def _():
        acc_ref[...] = jnp.zeros_like(acc_ref)

    x = x_ref[...]
    w = w_ref[...]
    if x.dtype != w.dtype:
        x = x.astype(w.dtype)
    acc_ref[...] += jnp.dot(x, w, preferred_element_type=jnp.float32)

    @pl.when(k == pl.num_programs(1) - 1)
    def _():
        o_ref[...] = _epilogue(acc_ref[...], b_ref[...], scale, act, o_ref.dtype)


# ---------------------------------------------------------------------------
# Wrapper.
# ---------------------------------------------------------------------------
_NBUF = 2  # default double-buffered weight stream: already saturates the DMA


def _n_axis_semantic(n_n):
    """Grid semantics for the N (output-panel) axis."""
    if n_n > 1 and _is_v7x() and hasattr(pltpu, "CORE_PARALLEL"):
        return pltpu.CORE_PARALLEL     # shard panels across v7x's 2 TensorCores
    return "parallel"


def fused_linear(x, w, b, *, scale=1.0, act="none"):
    """act(scale * x @ w + b) with a Pallas TPU kernel.

    x: [M, K] (f32), w: [K, N] (bf16 or f32, transposed vs. PyTorch's [N, K]),
    b: [N] (f32) -> [M, N] (f32)
    """
    M, K = x.shape
    Kw, N = w.shape
    assert K == Kw and b.shape == (N,)

    vmem_limit = int(_vmem_limit_bytes())
    itemsize = jnp.dtype(w.dtype).itemsize
    # Reserve room for the resident X copy, bias/output/accumulator tiles and
    # compiler-internal scratch; everything else goes to the weight stream.
    slack = 2 * M * K * jnp.dtype(x.dtype).itemsize + (8 << 20)
    wbudget = max(vmem_limit - slack, 1 << 20)

    tk, tn = _pick_tiles(K, N, itemsize, wbudget, _NBUF)
    n_k, n_n = K // tk, N // tn

    b2 = b.reshape(1, N)
    out_shape = jax.ShapeDtypeStruct((M, N), jnp.float32)

    def _build(n_sem):
        if n_k == 1:
            # K collapsed: no accumulator, grid purely parallel over N panels.
            kernel = functools.partial(_linear_simple_kernel, scale=scale, act=act)
            grid_spec = pltpu.PrefetchScalarGridSpec(
                num_scalar_prefetch=0,
                grid=(n_n,),
                in_specs=[
                    pl.BlockSpec((M, K), lambda n: (0, 0)),    # X resident
                    pl.BlockSpec((K, tn), lambda n: (0, n)),   # W streamed
                    pl.BlockSpec((1, tn), lambda n: (0, n)),   # bias
                ],
                out_specs=pl.BlockSpec((M, tn), lambda n: (0, n)),
            )
            semantics = (n_sem,)
        else:
            kernel = functools.partial(_linear_acc_kernel, scale=scale, act=act)
            arb = "arbitrary" if isinstance(n_sem, str) else pltpu.ARBITRARY
            grid_spec = pltpu.PrefetchScalarGridSpec(
                num_scalar_prefetch=0,
                grid=(n_n, n_k),
                in_specs=[
                    pl.BlockSpec((M, tk), lambda n, k: (0, k)),    # X K-slice
                    pl.BlockSpec((tk, tn), lambda n, k: (k, n)),   # W streamed
                    pl.BlockSpec((1, tn), lambda n, k: (0, n)),    # bias
                ],
                out_specs=pl.BlockSpec((M, tn), lambda n, k: (0, n)),
                scratch_shapes=[pltpu.VMEM((M, tn), jnp.float32)],
            )
            semantics = (n_sem, arb)
        return pl.pallas_call(
            kernel,
            out_shape=out_shape,
            grid_spec=grid_spec,
            compiler_params=pltpu.CompilerParams(
                dimension_semantics=semantics,
                vmem_limit_bytes=vmem_limit,
            ),
        )

    n_sem = _n_axis_semantic(n_n)
    if isinstance(n_sem, str):
        return _build(n_sem)(x, w, b2)
    try:
        return _build(n_sem)(x, w, b2)
    except Exception:
        # CORE_PARALLEL unsupported on this part/toolchain; plain "parallel"
        # is always valid, and any unrelated error will re-raise from here.
        return _build("parallel")(x, w, b2)


# ---------------------------------------------------------------------------
# Model (matches the PyTorch spec).
# ---------------------------------------------------------------------------
def init_linear_params(key, indim, outdim, dtype=jnp.float32):
    # Deterministic init mimicking torch.nn.Linear: U(-1/sqrt(fan_in), +).
    kw, kb = jax.random.split(key)
    bound = 1.0 / jnp.sqrt(jnp.array(indim, dtype=jnp.float32))
    # stored as [in, out] (transposed vs. PyTorch's [out, in])
    w = jax.random.uniform(kw, (indim, outdim), dtype, minval=-bound, maxval=bound)
    b = jax.random.uniform(kb, (outdim,), dtype, minval=-bound, maxval=bound)
    return w, b


def cast_weights_for_streaming(params, dtype=jnp.bfloat16):
    """Cast weight matrices (not biases) once, outside the kernels.

    Halves the HBM weight stream; matmuls keep f32 accumulation on the MXU.
    """
    return {k: (v.astype(dtype) if k.startswith("w") else v)
            for k, v in params.items()}


def model_forward(params, x):
    # Submod 1: lin1(x + x) -> relu -> lin2 ; GELU fused into lin2's epilogue
    h = fused_linear(x, params["w1"], params["b1"], scale=2.0, act="relu")    # [B, 6400]
    h = fused_linear(h, params["w2"], params["b2"], scale=1.0, act="gelu")    # [B, 6400]
    # Submod 2: lin1(out + out) -> relu -> lin2
    h = fused_linear(h, params["w3"], params["b3"], scale=2.0, act="relu")    # [B, 12800]
    out = fused_linear(h, params["w4"], params["b4"], scale=1.0, act="none")  # [B, 10]
    return out


def model_reference(params, x):
    """Pure-jnp reference using the exact same (bf16-weight, f32-acc) math."""
    def lin(h, w, b, scale, act):
        z = jnp.dot(h.astype(w.dtype), w, preferred_element_type=jnp.float32)
        return _apply_act(scale * z + b, act)
    h = lin(x, params["w1"], params["b1"], 2.0, "relu")
    h = lin(h, params["w2"], params["b2"], 1.0, "gelu")
    h = lin(h, params["w3"], params["b3"], 2.0, "relu")
    return lin(h, params["w4"], params["b4"], 1.0, "none")


if __name__ == "__main__":
    key = jax.random.PRNGKey(0)
    k0, k1, k2, k3, k4 = jax.random.split(key, 5)

    B = 8  # small batch
    INDIM, H1, O1 = 160, 6400, 6400
    H2, OUT = 12800, 10

    w1, b1 = init_linear_params(k1, INDIM, H1)   # sm1.lin1
    w2, b2 = init_linear_params(k2, H1, O1)      # sm1.lin2
    w3, b3 = init_linear_params(k3, O1, H2)      # sm2.lin1
    w4, b4 = init_linear_params(k4, H2, OUT)     # sm2.lin2
    params = dict(w1=w1, b1=b1, w2=w2, b2=b2, w3=w3, b3=b3, w4=w4, b4=b4)

    # Cast the weight stream to bf16 once (outside the kernels).
    params = cast_weights_for_streaming(params, jnp.bfloat16)

    x = jax.random.normal(k0, (B, INDIM), jnp.float32)

    out = model_forward(params, x)
    out = jax.block_until_ready(out)
    assert out.shape == (B, OUT), out.shape
    assert bool(jnp.isfinite(out).all())

    # Loose correctness check against an identically-quantized jnp reference.
    ref = jax.block_until_ready(model_reference(params, x))
    rel_err = float(jnp.linalg.norm(out - ref) / (jnp.linalg.norm(ref) + 1e-6))
    assert rel_err < 1e-2, rel_err

    print("KERNEL_OK")
</pallas_src>

<mosaic_0001>
module attributes {stable_mosaic.version = 11 : i64} {
  func.func @_linear_simple_kernel(%arg0: i32, %arg1: memref<8x160xf32, #tpu.memory_space<vmem>>, %arg2: memref<160x3200xbf16, #tpu.memory_space<vmem>>, %arg3: memref<1x3200xf32, #tpu.memory_space<vmem>>, %arg4: memref<8x3200xf32, #tpu.memory_space<vmem>>) attributes {dimension_semantics = [#tpu.dimension_semantics<parallel>], iteration_bounds = array<i64: 2>, scalar_prefetch = 0 : i64, scratch_operands = 0 : i64, tpu.core_type = #tpu.core_type<tc>, window_params = [{pipeline_mode = #tpu.pipeline_mode<synchronous>, transform_indices = @transform_0, window_bounds = array<i64: 8, 160>}, {transform_indices = @transform_1, window_bounds = array<i64: 160, 3200>}, {transform_indices = @transform_2, window_bounds = array<i64: 1, 3200>}, {transform_indices = @transform_3, window_bounds = array<i64: 8, 3200>}]} {
    %c0 = arith.constant 0 : index
    %c0_0 = arith.constant 0 : index
    %0 = vector.load %arg1[%c0, %c0_0] : memref<8x160xf32, #tpu.memory_space<vmem>>, vector<8x160xf32>
    %c0_1 = arith.constant 0 : index
    %c0_2 = arith.constant 0 : index
    %1 = vector.load %arg2[%c0_1, %c0_2] : memref<160x3200xbf16, #tpu.memory_space<vmem>>, vector<160x3200xbf16>
    %2 = arith.truncf %0 : vector<8x160xf32> to vector<8x160xbf16>
    %cst = arith.constant dense<0.000000e+00> : vector<8x3200xf32>
    %3 = tpu.matmul %2, %1, %cst {dimension_numbers = #tpu.dot_dimension_numbers<[1], [0], [0], [1], [0, 0, 1, 1], [], []>} : vector<8x160xbf16>, vector<160x3200xbf16>, vector<8x3200xf32> -> vector<8x3200xf32>
    %c0_3 = arith.constant 0 : index
    %c0_4 = arith.constant 0 : index
    %4 = vector.load %arg3[%c0_3, %c0_4] : memref<1x3200xf32, #tpu.memory_space<vmem>>, vector<1x3200xf32>
    %cst_5 = arith.constant 2.000000e+00 : f32
    %5 = vector.broadcast %cst_5 : f32 to vector<8x3200xf32>
    %6 = arith.mulf %3, %5 : vector<8x3200xf32>
    %7 = vector.broadcast %4 : vector<1x3200xf32> to vector<8x3200xf32>
    %8 = arith.addf %6, %7 : vector<8x3200xf32>
    %cst_6 = arith.constant 0.000000e+00 : f32
    %9 = vector.broadcast %cst_6 : f32 to vector<8x3200xf32>
    %10 = arith.maximumf %8, %9 : vector<8x3200xf32>
    %c0_7 = arith.constant 0 : index
    %c0_8 = arith.constant 0 : index
    %11 = vector.load %arg4[%c0_7, %c0_8] : memref<8x3200xf32, #tpu.memory_space<vmem>>, vector<8x3200xf32>
    tpu.vector_store %arg4[%c0_7, %c0_8], %10 {strides = array<i32>} : memref<8x3200xf32, #tpu.memory_space<vmem>>, vector<8x3200xf32>,
    return
  }
  func.func @transform_0(%arg0: i32) -> (i32, i32) {
    %c0_i32 = arith.constant 0 : i32
    %c0_i32_0 = arith.constant 0 : i32
    %c0_i32_1 = arith.constant 0 : i32
    return %c0_i32, %c0_i32_0 : i32, i32
  }
  func.func @transform_1(%arg0: i32) -> (i32, i32) {
    %c0_i32 = arith.constant 0 : i32
    %c0_i32_0 = arith.constant 0 : i32
    return %c0_i32, %arg0 : i32, i32
  }
  func.func @transform_2(%arg0: i32) -> (i32, i32) {
    %c0_i32 = arith.constant 0 : i32
    %c0_i32_0 = arith.constant 0 : i32
    return %c0_i32, %arg0 : i32, i32
  }
  func.func @transform_3(%arg0: i32) -> (i32, i32) {
    %c0_i32 = arith.constant 0 : i32
    %c0_i32_0 = arith.constant 0 : i32
    return %c0_i32, %arg0 : i32, i32
  }
}

</mosaic_0001>

<llo_original>
// kernel: tpu_custom_call.1
$region0: #{tpu_custom_call.1}
  #allocation0 [shape = 'u32[]', space=smem, size = 0x4, offset = 0x4, fixed_abs, tag = 'smem constant byte address 0x4 - core index']
  #allocation1 [shape = 'u32[72,128]{1,0:T(1,128)}', space=vmem, size = 0x9000, scoped, tag = 'internal scratch']
  %s0 = inlined_call_operand.hbm [shape: f32[8,160], index: 0, kind: input, shape index: {}]
  %s1 = inlined_call_operand.hbm [shape: bf16[160,6400], index: 1, kind: input, shape index: {}]
  %s2 = inlined_call_operand.hbm [shape: f32[1,6400], index: 2, kind: input, shape index: {}]
  %s3 = inlined_call_operand.hbm [shape: f32[8,6400], index: 3, kind: output, shape index: {}]
  %s4 = sld [smem:[#allocation0]]
  $region57: #{tpu_custom_call.1} parent=0
    _
  %s6 = ssub.s32 1, %s4
  %s7 = scalar_select 0, %s6, %s4
  $region1: #{tpu_custom_call.1} parent=0
    #allocation2 [shape = 'u8[8192]{0}', space=vmem, size = 0x2000, scoped, tag = 'input window, operand 0, single buffered']
    #allocation3 [shape = 's32[2]{0}', space=sflag, size = 0x8, scoped, tag = 'scoped memory for tpu_custom_call.1']
    #allocation4 [shape = 's32[2]{0}', space=sflag, size = 0x8, scoped, tag = 'scoped memory for tpu_custom_call.1']
    #allocation5 [shape = 'u8[2048000]{0}', space=vmem, size = 0x1f4000, scoped, tag = 'input window, operand 1']
    #allocation6 [shape = 's32[2]{0}', space=sflag, size = 0x8, scoped, tag = 'scoped memory for tpu_custom_call.1']
    #allocation7 [shape = 'u8[25600]{0}', space=vmem, size = 0x6400, scoped, tag = 'input window, operand 2']
    #allocation8 [shape = 'u8[204800]{0}', space=vmem, size = 0x32000, scoped, tag = 'output window, operand 0']
    %8 = vsyncpa [#allocation3], 0
    %9 = vsyncpa [#allocation6], 0
    %s10 = scalar_lea.sflag [#allocation6], 1
    %11 = vsyncpa %s10, 0
    %12 = vsyncpa [#allocation4], 0
    %s13 = scalar_lea.sflag [#allocation4], 1
    %14 = vsyncpa %s13, 0
    loop: start=0, step=1, limit=4
    $region2: #{tpu_custom_call.1} parent=1 // loop_pre_header
      _
    $region3: #{tpu_custom_call.1} parent=1 // loop_header
      %s16 = sphi 0, %s20
      %p17 = scmp.ge.s32.totalorder %s16, 4
      %s24 = sphi 0, %s24
      %s26 = sphi 0, %s24
      %s27 = sphi 0, %s26
      %s41 = sphi 0, %s27
      %s47 = sphi 0, %s49
      %s50 = sphi 0, %s47
      %s51 = sphi 0, %s50
      %s67 = sphi 0, %s51
      %s73 = sphi 0, %s75
      %s76 = sphi 0, %s73
      %s77 = sphi 0, %s76
      %s93 = sphi 0, %s77
      %s99 = sphi 0, %s101
      %s102 = sphi 0, %s99
      %s103 = sphi 0, %s102
      %s119 = sphi 0, %s103
    $region4: #{tpu_custom_call.1} parent=1 // loop_header_branch
      %19 = sbr.rel (%p17) target = $region8
    $region5: #{tpu_custom_call.1} parent=1 // loop_body
      %s21 = ssub.s32 %s16, 1
      %s22 = ssub.s32 %s16, 2
      %s23 = sadd.s32 %s16, 1
      %s25 = sadd.s32 %s24, 1
      %p28 = scmp.eq.s32.totalorder %s16, 1
      %p29 = scmp.ne.s32.totalorder %s24, %s26
      %p30 = scmp.eq.s32.totalorder %s16, 0
      %p31 = por %p29, %p30
      %p32 = scmp.ne.s32.totalorder %s24, %s26
      %p33 = scmp.eq.s32.totalorder %s21, 1
      %p34 = por %p32, %p33
      %p35 = scmp.ne.s32.totalorder %s26, %s27
      %p36 = scmp.eq.s32.totalorder %s21, 0
      %p37 = por %p35, %p36
      %p38 = scmp.ne.s32.totalorder %s26, %s27
      %p39 = scmp.eq.s32.totalorder %s22, 1
      %p40 = por %p38, %p39
      %p42 = scmp.ne.s32.totalorder %s27, %s41
      %p43 = scmp.eq.s32.totalorder %s22, 0
      %p44 = por %p42, %p43
      %s45 = ssub.s32 %s16, %s23
      %p46 = scmp.eq.s32.totalorder %s45, 0
      %s48 = sadd.s32 %s47, 1
      %s49 = scalar_select %p46, %s47, %s48
      %p52 = pneg %p46
      %p53 = scmp.eq.s32.totalorder %s16, 1
      %p54 = por %p52, %p53
      %p55 = scmp.ne.s32.totalorder %s47, %s50
      %p56 = scmp.eq.s32.totalorder %s16, 0
      %p57 = por %p55, %p56
      %p58 = scmp.ne.s32.totalorder %s47, %s50
      %p59 = scmp.eq.s32.totalorder %s21, 1
      %p60 = por %p58, %p59
      %p61 = scmp.ne.s32.totalorder %s50, %s51
      %p62 = scmp.eq.s32.totalorder %s21, 0
      %p63 = por %p61, %p62
      %p64 = scmp.ne.s32.totalorder %s50, %s51
      %p65 = scmp.eq.s32.totalorder %s22, 1
      %p66 = por %p64, %p65
      %p68 = scmp.ne.s32.totalorder %s51, %s67
      %p69 = scmp.eq.s32.totalorder %s22, 0
      %p70 = por %p68, %p69
      %s71 = ssub.s32 %s16, %s23
      %p72 = scmp.eq.s32.totalorder %s71, 0
      %s74 = sadd.s32 %s73, 1
      %s75 = scalar_select %p72, %s73, %s74
      %p78 = pneg %p72
      %p79 = scmp.eq.s32.totalorder %s16, 1
      %p80 = por %p78, %p79
      %p81 = scmp.ne.s32.totalorder %s73, %s76
      %p82 = scmp.eq.s32.totalorder %s16, 0
      %p83 = por %p81, %p82
      %p84 = scmp.ne.s32.totalorder %s73, %s76
      %p85 = scmp.eq.s32.totalorder %s21, 1
      %p86 = por %p84, %p85
      %p87 = scmp.ne.s32.totalorder %s76, %s77
      %p88 = scmp.eq.s32.totalorder %s21, 0
      %p89 = por %p87, %p88
      %p90 = scmp.ne.s32.totalorder %s76, %s77
      %p91 = scmp.eq.s32.totalorder %s22, 1
      %p92 = por %p90, %p91
      %p94 = scmp.ne.s32.totalorder %s77, %s93
      %p95 = scmp.eq.s32.totalorder %s22, 0
      %p96 = por %p94, %p95
      %s97 = ssub.s32 %s16, %s23
      %p98 = scmp.eq.s32.totalorder %s97, 0
      %s100 = sadd.s32 %s99, 1
      %s101 = scalar_select %p98, %s99, %s100
      %p104 = pneg %p98
      %p105 = scmp.eq.s32.totalorder %s16, 1
      %p106 = por %p104, %p105
      %p107 = scmp.ne.s32.totalorder %s99, %s102
      %p108 = scmp.eq.s32.totalorder %s16, 0
      %p109 = por %p107, %p108
      %p110 = scmp.ne.s32.totalorder %s99, %s102
      %p111 = scmp.eq.s32.totalorder %s21, 1
      %p112 = por %p110, %p111
      %p113 = scmp.ne.s32.totalorder %s102, %s103
      %p114 = scmp.eq.s32.totalorder %s21, 0
      %p115 = por %p113, %p114
      %p116 = scmp.ne.s32.totalorder %s102, %s103
      %p117 = scmp.eq.s32.totalorder %s22, 1
      %p118 = por %p116, %p117
      %p120 = scmp.ne.s32.totalorder %s103, %s119
      %p121 = scmp.eq.s32.totalorder %s22, 0
      %p122 = por %p120, %p121
      %p123 = scmp.le.s32.totalorder 1, %s16
      %p124 = scmp.lt.s32.totalorder %s16, 3
      %p125 = pnand %p123, %p124
      %p126 = pneg %p125
      // Predicated region
      $region9: #{tpu_custom_call.1} parent=5 // pred_check
        _
      $region10: #{tpu_custom_call.1} parent=5 // pred_check_branch
        %128 = sbr.rel (%p125) target = $region12
      $region11: #{tpu_custom_call.1} parent=5 // pred_region
        %s129 = ssub.s32 %s16, 1
        // Predicated region
        $region13: #{tpu_custom_call.1} parent=11 // pred_check
          %p130 = pneg %p37
        $region14: #{tpu_custom_call.1} parent=11 // pred_check_branch
          %132 = sbr.rel (%p130) target = $region16
        $region15: #{tpu_custom_call.1} parent=11 // pred_region
          %134 = vsyncadd [#allocation3], 0
          %s136 = sshll.u32 %s0, 4
          %s137 = int_to_ptr.hbm [resolvable:$true] %s136
          %s138 = sshll.u32 [#allocation2], 4
          %s139 = int_to_ptr.vmem [resolvable:$true] %s138
          %141 = dma.hbm_to_vmem [thread:$0]  %s137, 256, %s139, [#allocation3]
        $region16: #{tpu_custom_call.1} parent=11 // pred_fallthru
          _
      $region12: #{tpu_custom_call.1} parent=5 // pred_fallthru
        _
      %p142 = scmp.lt.s32.totalorder %s16, 2
      // Predicated region
      $region17: #{tpu_custom_call.1} parent=5 // pred_check
        %p143 = pneg %p142
      $region18: #{tpu_custom_call.1} parent=5 // pred_check_branch
        %145 = sbr.rel (%p143) target = $region20
      $region19: #{tpu_custom_call.1} parent=5 // pred_region
        // Predicated region
        $region21: #{tpu_custom_call.1} parent=19 // pred_check
          %p146 = pneg %p57
        $region22: #{tpu_custom_call.1} parent=19 // pred_check_branch
          %148 = sbr.rel (%p146) target = $region24
        $region23: #{tpu_custom_call.1} parent=19 // pred_region
          %s149 = sand.u32 %s16, 1
          %s150 = scalar_lea.sflag [#allocation6], %s149
          %s151 = sand.u32 %s47, 1
          %s152 = smul.addr %s151, 2000
          %s153 = scalar_lea.vmem [#allocation5], %s152
          %s154 = smul.u32 25, %s16
          %156 = vsyncadd %s150, 0
          %s157 = smul.addr %s154, 4
          %s158 = scalar_lea.hbm %s1, %s157
          %s159 = sshll.u32 %s158, 4
          %s160 = int_to_ptr.hbm [resolvable:$true] %s159
          %s161 = sshll.u32 %s153, 4
          %s162 = int_to_ptr.vmem [resolvable:$true] %s161
          %167 = dma.hbm_to_vmem [thread:$0]  %s160, 32000, %s162, %s150, 3200, 1600, 100
        $region24: #{tpu_custom_call.1} parent=19 // pred_fallthru
          _
        // Predicated region
        $region25: #{tpu_custom_call.1} parent=19 // pred_check
          %p168 = pneg %p83
        $region26: #{tpu_custom_call.1} parent=19 // pred_check_branch
          %170 = sbr.rel (%p168) target = $region28
        $region27: #{tpu_custom_call.1} parent=19 // pred_region
          %s171 = sand.u32 %s16, 1
          %s172 = scalar_lea.sflag [#allocation6], %s171
          %s173 = sand.u32 %s73, 1
          %s174 = smul.addr %s173, 25
          %s175 = scalar_lea.vmem [#allocation7], %s174
          %s176 = smul.u32 25, %s16
          %178 = vsyncadd %s172, 0
          %s179 = scalar_lea.hbm %s2, %s176
          %s181 = sshll.u32 %s179, 4
          %s182 = int_to_ptr.hbm [resolvable:$true] %s181
          %s183 = sshll.u32 %s175, 4
          %s184 = int_to_ptr.vmem [resolvable:$true] %s183
          %186 = dma.hbm_to_vmem [thread:$0]  %s182, 400, %s184, %s172
        $region28: #{tpu_custom_call.1} parent=19 // pred_fallthru
          _
      $region20: #{tpu_custom_call.1} parent=5 // pred_fallthru
        _
      %p187 = scmp.le.s32.totalorder 1, %s16
      %p188 = scmp.lt.s32.totalorder %s16, 3
      %p189 = pnand %p187, %p188
      %p190 = pneg %p189
      // Predicated region
      $region29: #{tpu_custom_call.1} parent=5 // pred_check
        _
      $region30: #{tpu_custom_call.1} parent=5 // pred_check_branch
        %192 = sbr.rel (%p189) target = $region32
      $region31: #{tpu_custom_call.1} parent=5 // pred_region
        %s193 = ssub.s32 %s16, 1
        // Predicated region
        $region33: #{tpu_custom_call.1} parent=31 // pred_check
          %p194 = pneg %p37
        $region34: #{tpu_custom_call.1} parent=31 // pred_check_branch
          %196 = sbr.rel (%p194) target = $region36
        $region35: #{tpu_custom_call.1} parent=31 // pred_region
          %198 = dma.done [#allocation3], 256
        $region36: #{tpu_custom_call.1} parent=31 // pred_fallthru
          _
        %s199 = sand.u32 %s21, 1
        %s200 = scalar_lea.sflag [#allocation6], %s199
        %s201 = sand.u32 %s50, 1
        %s202 = smul.addr %s201, 2000
        %s203 = scalar_lea.vmem [#allocation5], %s202
        // Predicated region
        $region37: #{tpu_custom_call.1} parent=31 // pred_check
          %p204 = pneg %p63
        $region38: #{tpu_custom_call.1} parent=31 // pred_check_branch
          %206 = sbr.rel (%p204) target = $region40
        $region39: #{tpu_custom_call.1} parent=31 // pred_region
          %208 = dma.done %s200, 32000
        $region40: #{tpu_custom_call.1} parent=31 // pred_fallthru
          _
        %s209 = sand.u32 %s21, 1
        %s210 = scalar_lea.sflag [#allocation6], %s209
        %s211 = sand.u32 %s76, 1
        %s212 = smul.addr %s211, 25
        %s213 = scalar_lea.vmem [#allocation7], %s212
        // Predicated region
        $region41: #{tpu_custom_call.1} parent=31 // pred_check
          %p214 = pneg %p89
        $region42: #{tpu_custom_call.1} parent=31 // pred_check_branch
          %216 = sbr.rel (%p214) target = $region44
        $region43: #{tpu_custom_call.1} parent=31 // pred_region
          %218 = dma.done %s210, 400
        $region44: #{tpu_custom_call.1} parent=31 // pred_fallthru
          _
        %p219 = pneg %p37
        %p220 = pneg %p34
        %s221 = sand.u32 %s21, 1
        %s222 = scalar_lea.sflag [#allocation6], %s221
        %s223 = sand.u32 %s50, 1
        %s224 = smul.addr %s223, 2000
        %s225 = scalar_lea.vmem [#allocation5], %s224
        %p226 = pneg %p63
        %p227 = pneg %p60
        %s228 = sand.u32 %s21, 1
        %s229 = scalar_lea.sflag [#allocation6], %s228
        %s230 = sand.u32 %s76, 1
        %s231 = smul.addr %s230, 25
        %s232 = scalar_lea.vmem [#allocation7], %s231
        %p233 = pneg %p89
        %p234 = pneg %p86
        %p235 = pneg %p115
        %p236 = pneg %p112
        %s237 = sand.u32 %s102, 1
        %s238 = scalar_lea.sflag [#allocation4], %s237
        %s239 = sand.u32 %s102, 1
        %s240 = smul.addr %s239, 200
        %s241 = scalar_lea.vmem [#allocation8], %s240
        %s242 = smul.u32 25, %s21
        %s243 = smul.u32 25, %s21
        %s244 = smul.u32 25, %s21
        %v246 = vld [vmem:[#allocation2] sm:$0xff]
        %v247 = vld [vmem:[#allocation2 + $0x8] sm:$0xff]
        %v248 = vld [vmem:[%s203] sm:$0xff]
        %v249 = vld [vmem:[%s203 + $0x8] sm:$0xff]
        %v250 = vld [vmem:[%s203 + $0x10] sm:$0xff]
        %v251 = vld [vmem:[%s203 + $0x18] sm:$0xff]
        %v252 = vld [vmem:[%s203 + $0x20] sm:$0xff]
        %v253 = vld [vmem:[%s203 + $0x28] sm:$0xff]
        %v254 = vld [vmem:[%s203 + $0x30] sm:$0xff]
        %v255 = vld [vmem:[%s203 + $0x38] sm:$0xff]
        %v256 = vld [vmem:[%s203 + $0x40] sm:$0xff]
        %v257 = vld [vmem:[%s203 + $0x48] sm:$0xff]
        %v258 = vld [vmem:[%s203 + $0x50] sm:$0xff]
        %v259 = vld [vmem:[%s203 + $0x58] sm:$0xff]
        %v260 = vld [vmem:[%s203 + $0x60] sm:$0xf]
        %v261 = vld [vmem:[%s203 + $0x64] sm:$0xff]
        %v262 = vld [vmem:[%s203 + $0x6c] sm:$0xff]
        %v263 = vld [vmem:[%s203 + $0x74] sm:$0xff]
        %v264 = vld [vmem:[%s203 + $0x7c] sm:$0xff]
        %v265 = vld [vmem:[%s203 + $0x84] sm:$0xff]
        %v266 = vld [vmem:[%s203 + $0x8c] sm:$0xff]
        %v267 = vld [vmem:[%s203 + $0x94] sm:$0xff]
        %v268 = vld [vmem:[%s203 + $0x9c] sm:$0xff]
        %v269 = vld [vmem:[%s203 + $0xa4] sm:$0xff]
        %v270 = vld [vmem:[%s203 + $0xac] sm:$0xff]
        %v271 = vld [vmem:[%s203 + $0xb4] sm:$0xff]
        %v272 = vld [vmem:[%s203 + $0xbc] sm:$0xff]
        %v273 = vld [vmem:[%s203 + $0xc4] sm:$0xf]
        %v274 = vld [vmem:[%s203 + $0xc8] sm:$0xff]
        %v275 = vld [vmem:[%s203 + $0xd0] sm:$0xff]
        %v276 = vld [vmem:[%s203 + $0xd8] sm:$0xff]
        %v277 = vld [vmem:[%s203 + $0xe0] sm:$0xff]
        %v278 = vld [vmem:[%s203 + $0xe8] sm:$0xff]
        %v279 = vld [vmem:[%s203 + $0xf0] sm:$0xff]
        %v280 = vld [vmem:[%s203 + $0xf8] sm:$0xff]
        %v281 = vld [vmem:[%s203 + $0x100] sm:$0xff]
        %v282 = vld [vmem:[%s203 + $0x108] sm:$0xff]
        %v283 = vld [vmem:[%s203 + $0x110] sm:$0xff]
        %v284 = vld [vmem:[%s203 + $0x118] sm:$0xff]
        %v285 = vld [vmem:[%s203 + $0x120] sm:$0xff]
        %v286 = vld [vmem:[%s203 + $0x128] sm:$0xf]
        %v287 = vld [vmem:[%s203 + $0x12c] sm:$0xff]
        %v288 = vld [vmem:[%s203 + $0x134] sm:$0xff]
        %v289 = vld [vmem:[%s203 + $0x13c] sm:$0xff]
        %v290 = vld [vmem:[%s203 + $0x144] sm:$0xff]
        %v291 = vld [vmem:[%s203 + $0x14c] sm:$0xff]
        %v292 = vld [vmem:[%s203 + $0x154] sm:$0xff]
        %v293 = vld [vmem:[%s203 + $0x15c] sm:$0xff]
        %v294 = vld [vmem:[%s203 + $0x164] sm:$0xff]
        %v295 = vld [vmem:[%s203 + $0x16c] sm:$0xff]
        %v296 = vld [vmem:[%s203 + $0x174] sm:$0xff]
        %v297 = vld [vmem:[%s203 + $0x17c] sm:$0xff]
        %v298 = vld [vmem:[%s203 + $0x184] sm:$0xff]
        %v299 = vld [vmem:[%s203 + $0x18c] sm:$0xf]
        %v300 = vld [vmem:[%s203 + $0x190] sm:$0xff]
        %v301 = vld [vmem:[%s203 + $0x198] sm:$0xff]
        %v302 = vld [vmem:[%s203 + $0x1a0] sm:$0xff]
        %v303 = vld [vmem:[%s203 + $0x1a8] sm:$0xff]
        %v304 = vld [vmem:[%s203 + $0x1b0] sm:$0xff]
        %v305 = vld [vmem:[%s203 + $0x1b8] sm:$0xff]
        %v306 = vld [vmem:[%s203 + $0x1c0] sm:$0xff]
        %v307 = vld [vmem:[%s203 + $0x1c8] sm:$0xff]
        %v308 = vld [vmem:[%s203 + $0x1d0] sm:$0xff]
        %v309 = vld [vmem:[%s203 + $0x1d8] sm:$0xff]
        %v310 = vld [vmem:[%s203 + $0x1e0] sm:$0xff]
        %v311 = vld [vmem:[%s203 + $0x1e8] sm:$0xff]
        %v312 = vld [vmem:[%s203 + $0x1f0] sm:$0xf]
        %v313 = vld [vmem:[%s203 + $0x1f4] sm:$0xff]
        %v314 = vld [vmem:[%s203 + $0x1fc] sm:$0xff]
        %v315 = vld [vmem:[%s203 + $0x204] sm:$0xff]
        %v316 = vld [vmem:[%s203 + $0x20c] sm:$0xff]
        %v317 = vld [vmem:[%s203 + $0x214] sm:$0xff]
        %v318 = vld [vmem:[%s203 + $0x21c] sm:$0xff]
        %v319 = vld [vmem:[%s203 + $0x224] sm:$0xff]
        %v320 = vld [vmem:[%s203 + $0x22c] sm:$0xff]
        %v321 = vld [vmem:[%s203 + $0x234] sm:$0xff]
        %v322 = vld [vmem:[%s203 + $0x23c] sm:$0xff]
        %v323 = vld [vmem:[%s203 + $0x244] sm:$0xff]
        %v324 = vld [vmem:[%s203 + $0x24c] sm:$0xff]
        %v325 = vld [vmem:[%s203 + $0x254] sm:$0xf]
        %v326 = vld [vmem:[%s203 + $0x258] sm:$0xff]
        %v327 = vld [vmem:[%s203 + $0x260] sm:$0xff]
        %v328 = vld [vmem:[%s203 + $0x268] sm:$0xff]
        %v329 = vld [vmem:[%s203 + $0x270] sm:$0xff]
        %v330 = vld [vmem:[%s203 + $0x278] sm:$0xff]
        %v331 = vld [vmem:[%s203 + $0x280] sm:$0xff]
        %v332 = vld [vmem:[%s203 + $0x288] sm:$0xff]
        %v333 = vld [vmem:[%s203 + $0x290] sm:$0xff]
        %v334 = vld [vmem:[%s203 + $0x298] sm:$0xff]
        %v335 = vld [vmem:[%s203 + $0x2a0] sm:$0xff]
        %v336 = vld [vmem:[%s203 + $0x2a8] sm:$0xff]
        %v337 = vld [vmem:[%s203 + $0x2b0] sm:$0xff]
        %v338 = vld [vmem:[%s203 + $0x2b8] sm:$0xf]
        %v339 = vld [vmem:[%s203 + $0x2bc] sm:$0xff]
        %v340 = vld [vmem:[%s203 + $0x2c4] sm:$0xff]
        %v341 = vld [vmem:[%s203 + $0x2cc] sm:$0xff]
        %v342 = vld [vmem:[%s203 + $0x2d4] sm:$0xff]
        %v343 = vld [vmem:[%s203 + $0x2dc] sm:$0xff]
        %v344 = vld [vmem:[%s203 + $0x2e4] sm:$0xff]
        %v345 = vld [vmem:[%s203 + $0x2ec] sm:$0xff]
        %v346 = vld [vmem:[%s203 + $0x2f4] sm:$0xff]
        %v347 = vld [vmem:[%s203 + $0x2fc] sm:$0xff]
        %v348 = vld [vmem:[%s203 + $0x304] sm:$0xff]
        %v349 = vld [vmem:[%s203 + $0x30c] sm:$0xff]
        %v350 = vld [vmem:[%s203 + $0x314] sm:$0xff]
        %v351 = vld [vmem:[%s203 + $0x31c] sm:$0xf]
        %v352 = vld [vmem:[%s203 + $0x320] sm:$0xff]
        %v353 = vld [vmem:[%s203 + $0x328] sm:$0xff]
        %v354 = vld [vmem:[%s203 + $0x330] sm:$0xff]
        %v355 = vld [vmem:[%s203 + $0x338] sm:$0xff]
        %v356 = vld [vmem:[%s203 + $0x340] sm:$0xff]
        %v357 = vld [vmem:[%s203 + $0x348] sm:$0xff]
        %v358 = vld [vmem:[%s203 + $0x350] sm:$0xff]
        %v359 = vld [vmem:[%s203 + $0x358] sm:$0xff]
        %v360 = vld [vmem:[%s203 + $0x360] sm:$0xff]
        %v361 = vld [vmem:[%s203 + $0x368] sm:$0xff]
        %v362 = vld [vmem:[%s203 + $0x370] sm:$0xff]
        %v363 = vld [vmem:[%s203 + $0x378] sm:$0xff]
        %v364 = vld [vmem:[%s203 + $0x380] sm:$0xf]
        %v365 = vld [vmem:[%s203 + $0x384] sm:$0xff]
        %v366 = vld [vmem:[%s203 + $0x38c] sm:$0xff]
        %v367 = vld [vmem:[%s203 + $0x394] sm:$0xff]
        %v368 = vld [vmem:[%s203 + $0x39c] sm:$0xff]
        %v369 = vld [vmem:[%s203 + $0x3a4] sm:$0xff]
        %v370 = vld [vmem:[%s203 + $0x3ac] sm:$0xff]
        %v371 = vld [vmem:[%s203 + $0x3b4] sm:$0xff]
        %v372 = vld [vmem:[%s203 + $0x3bc] sm:$0xff]
        %v373 = vld [vmem:[%s203 + $0x3c4] sm:$0xff]
        %v374 = vld [vmem:[%s203 + $0x3cc] sm:$0xff]
        %v375 = vld [vmem:[%s203 + $0x3d4] sm:$0xff]
        %v376 = vld [vmem:[%s203 + $0x3dc] sm:$0xff]
        %v377 = vld [vmem:[%s203 + $0x3e4] sm:$0xf]
        %v378 = vld [vmem:[%s203 + $0x3e8] sm:$0xff]
        %v379 = vld [vmem:[%s203 + $0x3f0] sm:$0xff]
        %v380 = vld [vmem:[%s203 + $0x3f8] sm:$0xff]
        %v381 = vld [vmem:[%s203 + $0x400] sm:$0xff]
        %v382 = vld [vmem:[%s203 + $0x408] sm:$0xff]
        %v383 = vld [vmem:[%s203 + $0x410] sm:$0xff]
        %v384 = vld [vmem:[%s203 + $0x418] sm:$0xff]
        %v385 = vld [vmem:[%s203 + $0x420] sm:$0xff]
        %v386 = vld [vmem:[%s203 + $0x428] sm:$0xff]
        %v387 = vld [vmem:[%s203 + $0x430] sm:$0xff]
        %v388 = vld [vmem:[%s203 + $0x438] sm:$0xff]
        %v389 = vld [vmem:[%s203 + $0x440] sm:$0xff]
        %v390 = vld [vmem:[%s203 + $0x448] sm:$0xf]
        %v391 = vld [vmem:[%s203 + $0x44c] sm:$0xff]
        %v392 = vld [vmem:[%s203 + $0x454] sm:$0xff]
        %v393 = vld [vmem:[%s203 + $0x45c] sm:$0xff]
        %v394 = vld [vmem:[%s203 + $0x464] sm:$0xff]
        %v395 = vld [vmem:[%s203 + $0x46c] sm:$0xff]
        %v396 = vld [vmem:[%s203 + $0x474] sm:$0xff]
        %v397 = vld [vmem:[%s203 + $0x47c] sm:$0xff]
        %v398 = vld [vmem:[%s203 + $0x484] sm:$0xff]
        %v399 = vld [vmem:[%s203 + $0x48c] sm:$0xff]
        %v400 = vld [vmem:[%s203 + $0x494] sm:$0xff]
        %v401 = vld [vmem:[%s203 + $0x49c] sm:$0xff]
        %v402 = vld [vmem:[%s203 + $0x4a4] sm:$0xff]
        %v403 = vld [vmem:[%s203 + $0x4ac] sm:$0xf]
        %v404 = vld [vmem:[%s203 + $0x4b0] sm:$0xff]
        %v405 = vld [vmem:[%s203 + $0x4b8] sm:$0xff]
        %v406 = vld [vmem:[%s203 + $0x4c0] sm:$0xff]
        %v407 = vld [vmem:[%s203 + $0x4c8] sm:$0xff]
        %v408 = vld [vmem:[%s203 + $0x4d0] sm:$0xff]
        %v409 = vld [vmem:[%s203 + $0x4d8] sm:$0xff]
        %v410 = vld [vmem:[%s203 + $0x4e0] sm:$0xff]
        %v411 = vld [vmem:[%s203 + $0x4e8] sm:$0xff]
        %v412 = vld [vmem:[%s203 + $0x4f0] sm:$0xff]
        %v413 = vld [vmem:[%s203 + $0x4f8] sm:$0xff]
        %v414 = vld [vmem:[%s203 + $0x500] sm:$0xff]
        %v415 = vld [vmem:[%s203 + $0x508] sm:$0xff]
        %v416 = vld [vmem:[%s203 + $0x510] sm:$0xf]
        %v417 = vld [vmem:[%s203 + $0x514] sm:$0xff]
        %v418 = vld [vmem:[%s203 + $0x51c] sm:$0xff]
        %v419 = vld [vmem:[%s203 + $0x524] sm:$0xff]
        %v420 = vld [vmem:[%s203 + $0x52c] sm:$0xff]
        %v421 = vld [vmem:[%s203 + $0x534] sm:$0xff]
        %v422 = vld [vmem:[%s203 + $0x53c] sm:$0xff]
        %v423 = vld [vmem:[%s203 + $0x544] sm:$0xff]
        %v424 = vld [vmem:[%s203 + $0x54c] sm:$0xff]
        %v425 = vld [vmem:[%s203 + $0x554] sm:$0xff]
        %v426 = vld [vmem:[%s203 + $0x55c] sm:$0xff]
        %v427 = vld [vmem:[%s203 + $0x564] sm:$0xff]
        %v428 = vld [vmem:[%s203 + $0x56c] sm:$0xff]
        %v429 = vld [vmem:[%s203 + $0x574] sm:$0xf]
        %v430 = vld [vmem:[%s203 + $0x578] sm:$0xff]
        %v431 = vld [vmem:[%s203 + $0x580] sm:$0xff]
        %v432 = vld [vmem:[%s203 + $0x588] sm:$0xff]
        %v433 = vld [vmem:[%s203 + $0x590] sm:$0xff]
        %v434 = vld [vmem:[%s203 + $0x598] sm:$0xff]
        %v435 = vld [vmem:[%s203 + $0x5a0] sm:$0xff]
        %v436 = vld [vmem:[%s203 + $0x5a8] sm:$0xff]
        %v437 = vld [vmem:[%s203 + $0x5b0] sm:$0xff]
        %v438 = vld [vmem:[%s203 + $0x5b8] sm:$0xff]
        %v439 = vld [vmem:[%s203 + $0x5c0] sm:$0xff]
        %v440 = vld [vmem:[%s203 + $0x5c8] sm:$0xff]
        %v441 = vld [vmem:[%s203 + $0x5d0] sm:$0xff]
        %v442 = vld [vmem:[%s203 + $0x5d8] sm:$0xf]
        %v443 = vld [vmem:[%s203 + $0x5dc] sm:$0xff]
        %v444 = vld [vmem:[%s203 + $0x5e4] sm:$0xff]
        %v445 = vld [vmem:[%s203 + $0x5ec] sm:$0xff]
        %v446 = vld [vmem:[%s203 + $0x5f4] sm:$0xff]
        %v447 = vld [vmem:[%s203 + $0x5fc] sm:$0xff]
        %v448 = vld [vmem:[%s203 + $0x604] sm:$0xff]
        %v449 = vld [vmem:[%s203 + $0x60c] sm:$0xff]
        %v450 = vld [vmem:[%s203 + $0x614] sm:$0xff]
        %v451 = vld [vmem:[%s203 + $0x61c] sm:$0xff]
        %v452 = vld [vmem:[%s203 + $0x624] sm:$0xff]
        %v453 = vld [vmem:[%s203 + $0x62c] sm:$0xff]
        %v454 = vld [vmem:[%s203 + $0x634] sm:$0xff]
        %v455 = vld [vmem:[%s203 + $0x63c] sm:$0xf]
        %v456 = vld [vmem:[%s203 + $0x640] sm:$0xff]
        %v457 = vld [vmem:[%s203 + $0x648] sm:$0xff]
        %v458 = vld [vmem:[%s203 + $0x650] sm:$0xff]
        %v459 = vld [vmem:[%s203 + $0x658] sm:$0xff]
        %v460 = vld [vmem:[%s203 + $0x660] sm:$0xff]
        %v461 = vld [vmem:[%s203 + $0x668] sm:$0xff]
        %v462 = vld [vmem:[%s203 + $0x670] sm:$0xff]
        %v463 = vld [vmem:[%s203 + $0x678] sm:$0xff]
        %v464 = vld [vmem:[%s203 + $0x680] sm:$0xff]
        %v465 = vld [vmem:[%s203 + $0x688] sm:$0xff]
        %v466 = vld [vmem:[%s203 + $0x690] sm:$0xff]
        %v467 = vld [vmem:[%s203 + $0x698] sm:$0xff]
        %v468 = vld [vmem:[%s203 + $0x6a0] sm:$0xf]
        %v469 = vld [vmem:[%s203 + $0x6a4] sm:$0xff]
        %v470 = vld [vmem:[%s203 + $0x6ac] sm:$0xff]
        %v471 = vld [vmem:[%s203 + $0x6b4] sm:$0xff]
        %v472 = vld [vmem:[%s203 + $0x6bc] sm:$0xff]
        %v473 = vld [vmem:[%s203 + $0x6c4] sm:$0xff]
        %v474 = vld [vmem:[%s203 + $0x6cc] sm:$0xff]
        %v475 = vld [vmem:[%s203 + $0x6d4] sm:$0xff]
        %v476 = vld [vmem:[%s203 + $0x6dc] sm:$0xff]
        %v477 = vld [vmem:[%s203 + $0x6e4] sm:$0xff]
        %v478 = vld [vmem:[%s203 + $0x6ec] sm:$0xff]
        %v479 = vld [vmem:[%s203 + $0x6f4] sm:$0xff]
        %v480 = vld [vmem:[%s203 + $0x6fc] sm:$0xff]
        %v481 = vld [vmem:[%s203 + $0x704] sm:$0xf]
        %v482 = vld [vmem:[%s203 + $0x708] sm:$0xff]
        %v483 = vld [vmem:[%s203 + $0x710] sm:$0xff]
        %v484 = vld [vmem:[%s203 + $0x718] sm:$0xff]
        %v485 = vld [vmem:[%s203 + $0x720] sm:$0xff]
        %v486 = vld [vmem:[%s203 + $0x728] sm:$0xff]
        %v487 = vld [vmem:[%s203 + $0x730] sm:$0xff]
        %v488 = vld [vmem:[%s203 + $0x738] sm:$0xff]
        %v489 = vld [vmem:[%s203 + $0x740] sm:$0xff]
        %v490 = vld [vmem:[%s203 + $0x748] sm:$0xff]
        %v491 = vld [vmem:[%s203 + $0x750] sm:$0xff]
        %v492 = vld [vmem:[%s203 + $0x758] sm:$0xff]
        %v493 = vld [vmem:[%s203 + $0x760] sm:$0xff]
        %v494 = vld [vmem:[%s203 + $0x768] sm:$0xf]
        %v495 = vld [vmem:[%s203 + $0x76c] sm:$0xff]
        %v496 = vld [vmem:[%s203 + $0x774] sm:$0xff]
        %v497 = vld [vmem:[%s203 + $0x77c] sm:$0xff]
        %v498 = vld [vmem:[%s203 + $0x784] sm:$0xff]
        %v499 = vld [vmem:[%s203 + $0x78c] sm:$0xff]
        %v500 = vld [vmem:[%s203 + $0x794] sm:$0xff]
        %v501 = vld [vmem:[%s203 + $0x79c] sm:$0xff]
        %v502 = vld [vmem:[%s203 + $0x7a4] sm:$0xff]
        %v503 = vld [vmem:[%s203 + $0x7ac] sm:$0xff]
        %v504 = vld [vmem:[%s203 + $0x7b4] sm:$0xff]
        %v505 = vld [vmem:[%s203 + $0x7bc] sm:$0xff]
        %v506 = vld [vmem:[%s203 + $0x7c4] sm:$0xff]
        %v507 = vld [vmem:[%s203 + $0x7cc] sm:$0xf]
        %v508 = vpack.c.bf16 %v246, %v246
        %v509 = vpack.c.bf16 %v247, %v247
        %v770 = vunpack.c.l.b16 %v248
        %v771 = vunpack.c.h.b16 %v248
        %v772 = vunpack.c.l.b16 %v249
        %v773 = vunpack.c.h.b16 %v249
        %v774 = vunpack.c.l.b16 %v250
        %v775 = vunpack.c.h.b16 %v250
        %v776 = vunpack.c.l.b16 %v251
        %v777 = vunpack.c.h.b16 %v251
        %v778 = vunpack.c.l.b16 %v252
        %v779 = vunpack.c.h.b16 %v252
        %v780 = vunpack.c.l.b16 %v253
        %v781 = vunpack.c.h.b16 %v253
        %v782 = vunpack.c.l.b16 %v254
        %v783 = vunpack.c.h.b16 %v254
        %v784 = vunpack.c.l.b16 %v255
        %v785 = vunpack.c.h.b16 %v255
        %v786 = vunpack.c.l.b16 %v256
        %v787 = vunpack.c.h.b16 %v256
        %v788 = vunpack.c.l.b16 %v257
        %v789 = vunpack.c.h.b16 %v257
        %v790 = vunpack.c.l.b16 %v258
        %v791 = vunpack.c.h.b16 %v258
        %v792 = vunpack.c.l.b16 %v259
        %v793 = vunpack.c.h.b16 %v259
        %v794 = vunpack.c.l.b16 %v260
        %v795 = vunpack.c.l.b16 %v261
        %v796 = vunpack.c.h.b16 %v261
        %v797 = vunpack.c.l.b16 %v262
        %v798 = vunpack.c.h.b16 %v262
        %v799 = vunpack.c.l.b16 %v263
        %v800 = vunpack.c.h.b16 %v263
        %v801 = vunpack.c.l.b16 %v264
        %v802 = vunpack.c.h.b16 %v264
        %v803 = vunpack.c.l.b16 %v265
        %v804 = vunpack.c.h.b16 %v265
        %v805 = vunpack.c.l.b16 %v266
        %v806 = vunpack.c.h.b16 %v266
        %v807 = vunpack.c.l.b16 %v267
        %v808 = vunpack.c.h.b16 %v267
        %v809 = vunpack.c.l.b16 %v268
        %v810 = vunpack.c.h.b16 %v268
        %v811 = vunpack.c.l.b16 %v269
        %v812 = vunpack.c.h.b16 %v269
        %v813 = vunpack.c.l.b16 %v270
        %v814 = vunpack.c.h.b16 %v270
        %v815 = vunpack.c.l.b16 %v271
        %v816 = vunpack.c.h.b16 %v271
        %v817 = vunpack.c.l.b16 %v272
        %v818 = vunpack.c.h.b16 %v272
        %v819 = vunpack.c.l.b16 %v273
        %v820 = vunpack.c.l.b16 %v274
        %v821 = vunpack.c.h.b16 %v274
        %v822 = vunpack.c.l.b16 %v275
        %v823 = vunpack.c.h.b16 %v275
        %v824 = vunpack.c.l.b16 %v276
        %v825 = vunpack.c.h.b16 %v276
        %v826 = vunpack.c.l.b16 %v277
        %v827 = vunpack.c.h.b16 %v277
        %v828 = vunpack.c.l.b16 %v278
        %v829 = vunpack.c.h.b16 %v278
        %v830 = vunpack.c.l.b16 %v279
        %v831 = vunpack.c.h.b16 %v279
        %v832 = vunpack.c.l.b16 %v280
        %v833 = vunpack.c.h.b16 %v280
        %v834 = vunpack.c.l.b16 %v281
        %v835 = vunpack.c.h.b16 %v281
        %v836 = vunpack.c.l.b16 %v282
        %v837 = vunpack.c.h.b16 %v282
        %v838 = vunpack.c.l.b16 %v283
        %v839 = vunpack.c.h.b16 %v283
        %v840 = vunpack.c.l.b16 %v284
        %v841 = vunpack.c.h.b16 %v284
        %v842 = vunpack.c.l.b16 %v285
        %v843 = vunpack.c.h.b16 %v285
        %v844 = vunpack.c.l.b16 %v286
        %v845 = vunpack.c.l.b16 %v287
        %v846 = vunpack.c.h.b16 %v287
        %v847 = vunpack.c.l.b16 %v288
        %v848 = vunpack.c.h.b16 %v288
        %v849 = vunpack.c.l.b16 %v289
        %v850 = vunpack.c.h.b16 %v289
        %v851 = vunpack.c.l.b16 %v290
        %v852 = vunpack.c.h.b16 %v290
        %v853 = vunpack.c.l.b16 %v291
        %v854 = vunpack.c.h.b16 %v291
        %v855 = vunpack.c.l.b16 %v292
        %v856 = vunpack.c.h.b16 %v292
        %v857 = vunpack.c.l.b16 %v293
        %v858 = vunpack.c.h.b16 %v293
        %v859 = vunpack.c.l.b16 %v294
        %v860 = vunpack.c.h.b16 %v294
        %v861 = vunpack.c.l.b16 %v295
        %v862 = vunpack.c.h.b16 %v295
        %v863 = vunpack.c.l.b16 %v296
        %v864 = vunpack.c.h.b16 %v296
        %v865 = vunpack.c.l.b16 %v297
        %v866 = vunpack.c.h.b16 %v297
        %v867 = vunpack.c.l.b16 %v298
        %v868 = vunpack.c.h.b16 %v298
        %v869 = vunpack.c.l.b16 %v299
        %v870 = vunpack.c.l.b16 %v300
        %v871 = vunpack.c.h.b16 %v300
        %v872 = vunpack.c.l.b16 %v301
        %v873 = vunpack.c.h.b16 %v301
        %v874 = vunpack.c.l.b16 %v302
        %v875 = vunpack.c.h.b16 %v302
        %v876 = vunpack.c.l.b16 %v303
        %v877 = vunpack.c.h.b16 %v303
        %v878 = vunpack.c.l.b16 %v304
        %v879 = vunpack.c.h.b16 %v304
        %v880 = vunpack.c.l.b16 %v305
        %v881 = vunpack.c.h.b16 %v305
        %v882 = vunpack.c.l.b16 %v306
        %v883 = vunpack.c.h.b16 %v306
        %v884 = vunpack.c.l.b16 %v307
        %v885 = vunpack.c.h.b16 %v307
        %v886 = vunpack.c.l.b16 %v308
        %v887 = vunpack.c.h.b16 %v308
        %v888 = vunpack.c.l.b16 %v309
        %v889 = vunpack.c.h.b16 %v309
        %v890 = vunpack.c.l.b16 %v310
        %v891 = vunpack.c.h.b16 %v310
        %v892 = vunpack.c.l.b16 %v311
        %v893 = vunpack.c.h.b16 %v311
        %v894 = vunpack.c.l.b16 %v312
        %v895 = vunpack.c.l.b16 %v313
        %v896 = vunpack.c.h.b16 %v313
        %v897 = vunpack.c.l.b16 %v314
        %v898 = vunpack.c.h.b16 %v314
        %v899 = vunpack.c.l.b16 %v315
        %v900 = vunpack.c.h.b16 %v315
        %v901 = vunpack.c.l.b16 %v316
        %v902 = vunpack.c.h.b16 %v316
        %v903 = vunpack.c.l.b16 %v317
        %v904 = vunpack.c.h.b16 %v317
        %v905 = vunpack.c.l.b16 %v318
        %v906 = vunpack.c.h.b16 %v318
        %v907 = vunpack.c.l.b16 %v319
        %v908 = vunpack.c.h.b16 %v319
        %v909 = vunpack.c.l.b16 %v320
        %v910 = vunpack.c.h.b16 %v320
        %v911 = vunpack.c.l.b16 %v321
        %v912 = vunpack.c.h.b16 %v321
        %v913 = vunpack.c.l.b16 %v322
        %v914 = vunpack.c.h.b16 %v322
        %v915 = vunpack.c.l.b16 %v323
        %v916 = vunpack.c.h.b16 %v323
        %v917 = vunpack.c.l.b16 %v324
        %v918 = vunpack.c.h.b16 %v324
        %v919 = vunpack.c.l.b16 %v325
        %v920 = vunpack.c.l.b16 %v326
        %v921 = vunpack.c.h.b16 %v326
        %v922 = vunpack.c.l.b16 %v327
        %v923 = vunpack.c.h.b16 %v327
        %v924 = vunpack.c.l.b16 %v328
        %v925 = vunpack.c.h.b16 %v328
        %v926 = vunpack.c.l.b16 %v329
        %v927 = vunpack.c.h.b16 %v329
        %v928 = vunpack.c.l.b16 %v330
        %v929 = vunpack.c.h.b16 %v330
        %v930 = vunpack.c.l.b16 %v331
        %v931 = vunpack.c.h.b16 %v331
        %v932 = vunpack.c.l.b16 %v332
        %v933 = vunpack.c.h.b16 %v332
        %v934 = vunpack.c.l.b16 %v333
        %v935 = vunpack.c.h.b16 %v333
        %v936 = vunpack.c.l.b16 %v334
        %v937 = vunpack.c.h.b16 %v334
        %v938 = vunpack.c.l.b16 %v335
        %v939 = vunpack.c.h.b16 %v335
        %v940 = vunpack.c.l.b16 %v336
        %v941 = vunpack.c.h.b16 %v336
        %v942 = vunpack.c.l.b16 %v337
        %v943 = vunpack.c.h.b16 %v337
        %v944 = vunpack.c.l.b16 %v338
        %v945 = vunpack.c.l.b16 %v339
        %v946 = vunpack.c.h.b16 %v339
        %v947 = vunpack.c.l.b16 %v340
        %v948 = vunpack.c.h.b16 %v340
        %v949 = vunpack.c.l.b16 %v341
        %v950 = vunpack.c.h.b16 %v341
        %v951 = vunpack.c.l.b16 %v342
        %v952 = vunpack.c.h.b16 %v342
        %v953 = vunpack.c.l.b16 %v343
        %v954 = vunpack.c.h.b16 %v343
        %v955 = vunpack.c.l.b16 %v344
        %v956 = vunpack.c.h.b16 %v344
        %v957 = vunpack.c.l.b16 %v345
        %v958 = vunpack.c.h.b16 %v345
        %v959 = vunpack.c.l.b16 %v346
        %v960 = vunpack.c.h.b16 %v346
        %v961 = vunpack.c.l.b16 %v347
        %v962 = vunpack.c.h.b16 %v347
        %v963 = vunpack.c.l.b16 %v348
        %v964 = vunpack.c.h.b16 %v348
        %v965 = vunpack.c.l.b16 %v349
        %v966 = vunpack.c.h.b16 %v349
        %v967 = vunpack.c.l.b16 %v350
        %v968 = vunpack.c.h.b16 %v350
        %v969 = vunpack.c.l.b16 %v351
        %v970 = vunpack.c.l.b16 %v352
        %v971 = vunpack.c.h.b16 %v352
        %v972 = vunpack.c.l.b16 %v353
        %v973 = vunpack.c.h.b16 %v353
        %v974 = vunpack.c.l.b16 %v354
        %v975 = vunpack.c.h.b16 %v354
        %v976 = vunpack.c.l.b16 %v355
        %v977 = vunpack.c.h.b16 %v355
        %v978 = vunpack.c.l.b16 %v356
        %v979 = vunpack.c.h.b16 %v356
        %v980 = vunpack.c.l.b16 %v357
        %v981 = vunpack.c.h.b16 %v357
        %v982 = vunpack.c.l.b16 %v358
        %v983 = vunpack.c.h.b16 %v358
        %v984 = vunpack.c.l.b16 %v359
        %v985 = vunpack.c.h.b16 %v359
        %v986 = vunpack.c.l.b16 %v360
        %v987 = vunpack.c.h.b16 %v360
        %v988 = vunpack.c.l.b16 %v361
        %v989 = vunpack.c.h.b16 %v361
        %v990 = vunpack.c.l.b16 %v362
        %v991 = vunpack.c.h.b16 %v362
        %v992 = vunpack.c.l.b16 %v363
        %v993 = vunpack.c.h.b16 %v363
        %v994 = vunpack.c.l.b16 %v364
        %v995 = vunpack.c.l.b16 %v365
        %v996 = vunpack.c.h.b16 %v365
        %v997 = vunpack.c.l.b16 %v366
        %v998 = vunpack.c.h.b16 %v366
        %v999 = vunpack.c.l.b16 %v367
        %v1000 = vunpack.c.h.b16 %v367
        %v1001 = vunpack.c.l.b16 %v368
        %v1002 = vunpack.c.h.b16 %v368
        %v1003 = vunpack.c.l.b16 %v369
        %v1004 = vunpack.c.h.b16 %v369
        %v1005 = vunpack.c.l.b16 %v370
        %v1006 = vunpack.c.h.b16 %v370
        %v1007 = vunpack.c.l.b16 %v371
        %v1008 = vunpack.c.h.b16 %v371
        %v1009 = vunpack.c.l.b16 %v372
        %v1010 = vunpack.c.h.b16 %v372
        %v1011 = vunpack.c.l.b16 %v373
        %v1012 = vunpack.c.h.b16 %v373
        %v1013 = vunpack.c.l.b16 %v374
        %v1014 = vunpack.c.h.b16 %v374
        %v1015 = vunpack.c.l.b16 %v375
        %v1016 = vunpack.c.h.b16 %v375
        %v1017 = vunpack.c.l.b16 %v376
        %v1018 = vunpack.c.h.b16 %v376
        %v1019 = vunpack.c.l.b16 %v377
        %v1020 = vunpack.c.l.b16 %v378
        %v1021 = vunpack.c.h.b16 %v378
        %v1022 = vunpack.c.l.b16 %v379
        %v1023 = vunpack.c.h.b16 %v379
        %v1024 = vunpack.c.l.b16 %v380
        %v1025 = vunpack.c.h.b16 %v380
        %v1026 = vunpack.c.l.b16 %v381
        %v1027 = vunpack.c.h.b16 %v381
        %v1028 = vunpack.c.l.b16 %v382
        %v1029 = vunpack.c.h.b16 %v382
        %v1030 = vunpack.c.l.b16 %v383
        %v1031 = vunpack.c.h.b16 %v383
        %v1032 = vunpack.c.l.b16 %v384
        %v1033 = vunpack.c.h.b16 %v384
        %v1034 = vunpack.c.l.b16 %v385
        %v1035 = vunpack.c.h.b16 %v385
        %v1036 = vunpack.c.l.b16 %v386
        %v1037 = vunpack.c.h.b16 %v386
        %v1038 = vunpack.c.l.b16 %v387
        %v1039 = vunpack.c.h.b16 %v387
        %v1040 = vunpack.c.l.b16 %v388
        %v1041 = vunpack.c.h.b16 %v388
        %v1042 = vunpack.c.l.b16 %v389
        %v1043 = vunpack.c.h.b16 %v389
        %v1044 = vunpack.c.l.b16 %v390
        %v1045 = vunpack.c.l.b16 %v391
        %v1046 = vunpack.c.h.b16 %v391
        %v1047 = vunpack.c.l.b16 %v392
        %v1048 = vunpack.c.h.b16 %v392
        %v1049 = vunpack.c.l.b16 %v393
        %v1050 = vunpack.c.h.b16 %v393
        %v1051 = vunpack.c.l.b16 %v394
        %v1052 = vunpack.c.h.b16 %v394
        %v1053 = vunpack.c.l.b16 %v395
        %v1054 = vunpack.c.h.b16 %v395
        %v1055 = vunpack.c.l.b16 %v396
        %v1056 = vunpack.c.h.b16 %v396
        %v1057 = vunpack.c.l.b16 %v397
        %v1058 = vunpack.c.h.b16 %v397
        %v1059 = vunpack.c.l.b16 %v398
        %v1060 = vunpack.c.h.b16 %v398
        %v1061 = vunpack.c.l.b16 %v399
        %v1062 = vunpack.c.h.b16 %v399
        %v1063 = vunpack.c.l.b16 %v400
        %v1064 = vunpack.c.h.b16 %v400
        %v1065 = vunpack.c.l.b16 %v401
        %v1066 = vunpack.c.h.b16 %v401
        %v1067 = vunpack.c.l.b16 %v402
        %v1068 = vunpack.c.h.b16 %v402
        %v1069 = vunpack.c.l.b16 %v403
        %v1070 = vunpack.c.l.b16 %v404
        %v1071 = vunpack.c.h.b16 %v404
        %v1072 = vunpack.c.l.b16 %v405
        %v1073 = vunpack.c.h.b16 %v405
        %v1074 = vunpack.c.l.b16 %v406
        %v1075 = vunpack.c.h.b16 %v406
        %v1076 = vunpack.c.l.b16 %v407
        %v1077 = vunpack.c.h.b16 %v407
        %v1078 = vunpack.c.l.b16 %v408
        %v1079 = vunpack.c.h.b16 %v408
        %v1080 = vunpack.c.l.b16 %v409
        %v1081 = vunpack.c.h.b16 %v409
        %v1082 = vunpack.c.l.b16 %v410
        %v1083 = vunpack.c.h.b16 %v410
        %v1084 = vunpack.c.l.b16 %v411
        %v1085 = vunpack.c.h.b16 %v411
        %v1086 = vunpack.c.l.b16 %v412
        %v1087 = vunpack.c.h.b16 %v412
        %v1088 = vunpack.c.l.b16 %v413
        %v1089 = vunpack.c.h.b16 %v413
        %v1090 = vunpack.c.l.b16 %v414
        %v1091 = vunpack.c.h.b16 %v414
        %v1092 = vunpack.c.l.b16 %v415
        %v1093 = vunpack.c.h.b16 %v415
        %v1094 = vunpack.c.l.b16 %v416
        %v1095 = vunpack.c.l.b16 %v417
        %v1096 = vunpack.c.h.b16 %v417
        %v1097 = vunpack.c.l.b16 %v418
        %v1098 = vunpack.c.h.b16 %v418
        %v1099 = vunpack.c.l.b16 %v419
        %v1100 = vunpack.c.h.b16 %v419
        %v1101 = vunpack.c.l.b16 %v420
        %v1102 = vunpack.c.h.b16 %v420
        %v1103 = vunpack.c.l.b16 %v421
        %v1104 = vunpack.c.h.b16 %v421
        %v1105 = vunpack.c.l.b16 %v422
        %v1106 = vunpack.c.h.b16 %v422
        %v1107 = vunpack.c.l.b16 %v423
        %v1108 = vunpack.c.h.b16 %v423
        %v1109 = vunpack.c.l.b16 %v424
        %v1110 = vunpack.c.h.b16 %v424
        %v1111 = vunpack.c.l.b16 %v425
        %v1112 = vunpack.c.h.b16 %v425
        %v1113 = vunpack.c.l.b16 %v426
        %v1114 = vunpack.c.h.b16 %v426
        %v1115 = vunpack.c.l.b16 %v427
        %v1116 = vunpack.c.h.b16 %v427
        %v1117 = vunpack.c.l.b16 %v428
        %v1118 = vunpack.c.h.b16 %v428
        %v1119 = vunpack.c.l.b16 %v429
        %v1120 = vunpack.c.l.b16 %v430
        %v1121 = vunpack.c.h.b16 %v430
        %v1122 = vunpack.c.l.b16 %v431
        %v1123 = vunpack.c.h.b16 %v431
        %v1124 = vunpack.c.l.b16 %v432
        %v1125 = vunpack.c.h.b16 %v432
        %v1126 = vunpack.c.l.b16 %v433
        %v1127 = vunpack.c.h.b16 %v433
        %v1128 = vunpack.c.l.b16 %v434
        %v1129 = vunpack.c.h.b16 %v434
        %v1130 = vunpack.c.l.b16 %v435
        %v1131 = vunpack.c.h.b16 %v435
        %v1132 = vunpack.c.l.b16 %v436
        %v1133 = vunpack.c.h.b16 %v436
        %v1134 = vunpack.c.l.b16 %v437
        %v1135 = vunpack.c.h.b16 %v437
        %v1136 = vunpack.c.l.b16 %v438
        %v1137 = vunpack.c.h.b16 %v438
        %v1138 = vunpack.c.l.b16 %v439
        %v1139 = vunpack.c.h.b16 %v439
        %v1140 = vunpack.c.l.b16 %v440
        %v1141 = vunpack.c.h.b16 %v440
        %v1142 = vunpack.c.l.b16 %v441
        %v1143 = vunpack.c.h.b16 %v441
        %v1144 = vunpack.c.l.b16 %v442
        %v1145 = vunpack.c.l.b16 %v443
        %v1146 = vunpack.c.h.b16 %v443
        %v1147 = vunpack.c.l.b16 %v444
        %v1148 = vunpack.c.h.b16 %v444
        %v1149 = vunpack.c.l.b16 %v445
        %v1150 = vunpack.c.h.b16 %v445
        %v1151 = vunpack.c.l.b16 %v446
        %v1152 = vunpack.c.h.b16 %v446
        %v1153 = vunpack.c.l.b16 %v447
        %v1154 = vunpack.c.h.b16 %v447
        %v1155 = vunpack.c.l.b16 %v448
        %v1156 = vunpack.c.h.b16 %v448
        %v1157 = vunpack.c.l.b16 %v449
        %v1158 = vunpack.c.h.b16 %v449
        %v1159 = vunpack.c.l.b16 %v450
        %v1160 = vunpack.c.h.b16 %v450
        %v1161 = vunpack.c.l.b16 %v451
        %v1162 = vunpack.c.h.b16 %v451
        %v1163 = vunpack.c.l.b16 %v452
        %v1164 = vunpack.c.h.b16 %v452
        %v1165 = vunpack.c.l.b16 %v453
        %v1166 = vunpack.c.h.b16 %v453
        %v1167 = vunpack.c.l.b16 %v454
        %v1168 = vunpack.c.h.b16 %v454
        %v1169 = vunpack.c.l.b16 %v455
        %v1170 = vunpack.c.l.b16 %v456
        %v1171 = vunpack.c.h.b16 %v456
        %v1172 = vunpack.c.l.b16 %v457
        %v1173 = vunpack.c.h.b16 %v457
        %v1174 = vunpack.c.l.b16 %v458
        %v1175 = vunpack.c.h.b16 %v458
        %v1176 = vunpack.c.l.b16 %v459
        %v1177 = vunpack.c.h.b16 %v459
        %v1178 = vunpack.c.l.b16 %v460
        %v1179 = vunpack.c.h.b16 %v460
        %v1180 = vunpack.c.l.b16 %v461
        %v1181 = vunpack.c.h.b16 %v461
        %v1182 = vunpack.c.l.b16 %v462
        %v1183 = vunpack.c.h.b16 %v462
        %v1184 = vunpack.c.l.b16 %v463
        %v1185 = vunpack.c.h.b16 %v463
        %v1186 = vunpack.c.l.b16 %v464
        %v1187 = vunpack.c.h.b16 %v464
        %v1188 = vunpack.c.l.b16 %v465
        %v1189 = vunpack.c.h.b16 %v465
        %v1190 = vunpack.c.l.b16 %v466
        %v1191 = vunpack.c.h.b16 %v466
        %v1192 = vunpack.c.l.b16 %v467
        %v1193 = vunpack.c.h.b16 %v467
        %v1194 = vunpack.c.l.b16 %v468
        %v1195 = vunpack.c.l.b16 %v469
        %v1196 = vunpack.c.h.b16 %v469
        %v1197 = vunpack.c.l.b16 %v470
        %v1198 = vunpack.c.h.b16 %v470
        %v1199 = vunpack.c.l.b16 %v471
        %v1200 = vunpack.c.h.b16 %v471
        %v1201 = vunpack.c.l.b16 %v472
        %v1202 = vunpack.c.h.b16 %v472
        %v1203 = vunpack.c.l.b16 %v473
        %v1204 = vunpack.c.h.b16 %v473
        %v1205 = vunpack.c.l.b16 %v474
        %v1206 = vunpack.c.h.b16 %v474
        %v1207 = vunpack.c.l.b16 %v475
        %v1208 = vunpack.c.h.b16 %v475
        %v1209 = vunpack.c.l.b16 %v476
        %v1210 = vunpack.c.h.b16 %v476
        %v1211 = vunpack.c.l.b16 %v477
        %v1212 = vunpack.c.h.b16 %v477
        %v1213 = vunpack.c.l.b16 %v478
        %v1214 = vunpack.c.h.b16 %v478
        %v1215 = vunpack.c.l.b16 %v479
        %v1216 = vunpack.c.h.b16 %v479
        %v1217 = vunpack.c.l.b16 %v480
        %v1218 = vunpack.c.h.b16 %v480
        %v1219 = vunpack.c.l.b16 %v481
        %v1220 = vunpack.c.l.b16 %v482
        %v1221 = vunpack.c.h.b16 %v482
        %v1222 = vunpack.c.l.b16 %v483
        %v1223 = vunpack.c.h.b16 %v483
        %v1224 = vunpack.c.l.b16 %v484
        %v1225 = vunpack.c.h.b16 %v484
        %v1226 = vunpack.c.l.b16 %v485
        %v1227 = vunpack.c.h.b16 %v485
        %v1228 = vunpack.c.l.b16 %v486
        %v1229 = vunpack.c.h.b16 %v486
        %v1230 = vunpack.c.l.b16 %v487
        %v1231 = vunpack.c.h.b16 %v487
        %v1232 = vunpack.c.l.b16 %v488
        %v1233 = vunpack.c.h.b16 %v488
        %v1234 = vunpack.c.l.b16 %v489
        %v1235 = vunpack.c.h.b16 %v489
        %v1236 = vunpack.c.l.b16 %v490
        %v1237 = vunpack.c.h.b16 %v490
        %v1238 = vunpack.c.l.b16 %v491
        %v1239 = vunpack.c.h.b16 %v491
        %v1240 = vunpack.c.l.b16 %v492
        %v1241 = vunpack.c.h.b16 %v492
        %v1242 = vunpack.c.l.b16 %v493
        %v1243 = vunpack.c.h.b16 %v493
        %v1244 = vunpack.c.l.b16 %v494
        %v1245 = vunpack.c.l.b16 %v495
        %v1246 = vunpack.c.h.b16 %v495
        %v1247 = vunpack.c.l.b16 %v496
        %v1248 = vunpack.c.h.b16 %v496
        %v1249 = vunpack.c.l.b16 %v497
        %v1250 = vunpack.c.h.b16 %v497
        %v1251 = vunpack.c.l.b16 %v498
        %v1252 = vunpack.c.h.b16 %v498
        %v1253 = vunpack.c.l.b16 %v499
        %v1254 = vunpack.c.h.b16 %v499
        %v1255 = vunpack.c.l.b16 %v500
        %v1256 = vunpack.c.h.b16 %v500
        %v1257 = vunpack.c.l.b16 %v501
        %v1258 = vunpack.c.h.b16 %v501
        %v1259 = vunpack.c.l.b16 %v502
        %v1260 = vunpack.c.h.b16 %v502
        %v1261 = vunpack.c.l.b16 %v503
        %v1262 = vunpack.c.h.b16 %v503
        %v1263 = vunpack.c.l.b16 %v504
        %v1264 = vunpack.c.h.b16 %v504
        %v1265 = vunpack.c.l.b16 %v505
        %v1266 = vunpack.c.h.b16 %v505
        %v1267 = vunpack.c.l.b16 %v506
        %v1268 = vunpack.c.h.b16 %v506
        %v1269 = vunpack.c.l.b16 %v507
        %v1270 = vpack.c.b16 %v795, %v770
        %v1271 = vpack.c.b16 %v796, %v771
        %v1272 = vpack.c.b16 %v797, %v772
        %v1273 = vpack.c.b16 %v798, %v773
        %v1274 = vpack.c.b16 %v799, %v774
        %v1275 = vpack.c.b16 %v800, %v775
        %v1276 = vpack.c.b16 %v801, %v776
        %v1277 = vpack.c.b16 %v802, %v777
        %v1278 = vpack.c.b16 %v803, %v778
        %v1279 = vpack.c.b16 %v804, %v779
        %v1280 = vpack.c.b16 %v805, %v780
        %v1281 = vpack.c.b16 %v806, %v781
        %v1282 = vpack.c.b16 %v807, %v782
        %v1283 = vpack.c.b16 %v808, %v783
        %v1284 = vpack.c.b16 %v809, %v784
        %v1285 = vpack.c.b16 %v810, %v785
        %v1286 = vpack.c.b16 %v811, %v786
        %v1287 = vpack.c.b16 %v812, %v787
        %v1288 = vpack.c.b16 %v813, %v788
        %v1289 = vpack.c.b16 %v814, %v789
        %v1290 = vpack.c.b16 %v815, %v790
        %v1291 = vpack.c.b16 %v816, %v791
        %v1292 = vpack.c.b16 %v817, %v792
        %v1293 = vpack.c.b16 %v818, %v793
        %v1294 = vpack.c.b16 %v819, %v794
        %v1295 = vpack.c.b16 %v845, %v820
        %v1296 = vpack.c.b16 %v846, %v821
        %v1297 = vpack.c.b16 %v847, %v822
        %v1298 = vpack.c.b16 %v848, %v823
        %v1299 = vpack.c.b16 %v849, %v824
        %v1300 = vpack.c.b16 %v850, %v825
        %v1301 = vpack.c.b16 %v851, %v826
        %v1302 = vpack.c.b16 %v852, %v827
        %v1303 = vpack.c.b16 %v853, %v828
        %v1304 = vpack.c.b16 %v854, %v829
        %v1305 = vpack.c.b16 %v855, %v830
        %v1306 = vpack.c.b16 %v856, %v831
        %v1307 = vpack.c.b16 %v857, %v832
        %v1308 = vpack.c.b16 %v858, %v833
        %v1309 = vpack.c.b16 %v859, %v834
        %v1310 = vpack.c.b16 %v860, %v835
        %v1311 = vpack.c.b16 %v861, %v836
        %v1312 = vpack.c.b16 %v862, %v837
        %v1313 = vpack.c.b16 %v863, %v838
        %v1314 = vpack.c.b16 %v864, %v839
        %v1315 = vpack.c.b16 %v865, %v840
        %v1316 = vpack.c.b16 %v866, %v841
        %v1317 = vpack.c.b16 %v867, %v842
        %v1318 = vpack.c.b16 %v868, %v843
        %v1319 = vpack.c.b16 %v869, %v844
        %v1320 = vpack.c.b16 %v895, %v870
        %v1321 = vpack.c.b16 %v896, %v871
        %v1322 = vpack.c.b16 %v897, %v872
        %v1323 = vpack.c.b16 %v898, %v873
        %v1324 = vpack.c.b16 %v899, %v874
        %v1325 = vpack.c.b16 %v900, %v875
        %v1326 = vpack.c.b16 %v901, %v876
        %v1327 = vpack.c.b16 %v902, %v877
        %v1328 = vpack.c.b16 %v903, %v878
        %v1329 = vpack.c.b16 %v904, %v879
        %v1330 = vpack.c.b16 %v905, %v880
        %v1331 = vpack.c.b16 %v906, %v881
        %v1332 = vpack.c.b16 %v907, %v882
        %v1333 = vpack.c.b16 %v908, %v883
        %v1334 = vpack.c.b16 %v909, %v884
        %v1335 = vpack.c.b16 %v910, %v885
        %v1336 = vpack.c.b16 %v911, %v886
        %v1337 = vpack.c.b16 %v912, %v887
        %v1338 = vpack.c.b16 %v913, %v888
        %v1339 = vpack.c.b16 %v914, %v889
        %v1340 = vpack.c.b16 %v915, %v890
        %v1341 = vpack.c.b16 %v916, %v891
        %v1342 = vpack.c.b16 %v917, %v892
        %v1343 = vpack.c.b16 %v918, %v893
        %v1344 = vpack.c.b16 %v919, %v894
        %v1345 = vpack.c.b16 %v945, %v920
        %v1346 = vpack.c.b16 %v946, %v921
        %v1347 = vpack.c.b16 %v947, %v922
        %v1348 = vpack.c.b16 %v948, %v923
        %v1349 = vpack.c.b16 %v949, %v924
        %v1350 = vpack.c.b16 %v950, %v925
        %v1351 = vpack.c.b16 %v951, %v926
        %v1352 = vpack.c.b16 %v952, %v927
        %v1353 = vpack.c.b16 %v953, %v928
        %v1354 = vpack.c.b16 %v954, %v929
        %v1355 = vpack.c.b16 %v955, %v930
        %v1356 = vpack.c.b16 %v956, %v931
        %v1357 = vpack.c.b16 %v957, %v932
        %v1358 = vpack.c.b16 %v958, %v933
        %v1359 = vpack.c.b16 %v959, %v934
        %v1360 = vpack.c.b16 %v960, %v935
        %v1361 = vpack.c.b16 %v961, %v936
        %v1362 = vpack.c.b16 %v962, %v937
        %v1363 = vpack.c.b16 %v963, %v938
        %v1364 = vpack.c.b16 %v964, %v939
        %v1365 = vpack.c.b16 %v965, %v940
        %v1366 = vpack.c.b16 %v966, %v941
        %v1367 = vpack.c.b16 %v967, %v942
        %v1368 = vpack.c.b16 %v968, %v943
        %v1369 = vpack.c.b16 %v969, %v944
        %v1370 = vpack.c.b16 %v995, %v970
        %v1371 = vpack.c.b16 %v996, %v971
        %v1372 = vpack.c.b16 %v997, %v972
        %v1373 = vpack.c.b16 %v998, %v973
        %v1374 = vpack.c.b16 %v999, %v974
        %v1375 = vpack.c.b16 %v1000, %v975
        %v1376 = vpack.c.b16 %v1001, %v976
        %v1377 = vpack.c.b16 %v1002, %v977
        %v1378 = vpack.c.b16 %v1003, %v978
        %v1379 = vpack.c.b16 %v1004, %v979
        %v1380 = vpack.c.b16 %v1005, %v980
        %v1381 = vpack.c.b16 %v1006, %v981
        %v1382 = vpack.c.b16 %v1007, %v982
        %v1383 = vpack.c.b16 %v1008, %v983
        %v1384 = vpack.c.b16 %v1009, %v984
        %v1385 = vpack.c.b16 %v1010, %v985
        %v1386 = vpack.c.b16 %v1011, %v986
        %v1387 = vpack.c.b16 %v1012, %v987
        %v1388 = vpack.c.b16 %v1013, %v988
        %v1389 = vpack.c.b16 %v1014, %v989
        %v1390 = vpack.c.b16 %v1015, %v990
        %v1391 = vpack.c.b16 %v1016, %v991
        %v1392 = vpack.c.b16 %v1017, %v992
        %v1393 = vpack.c.b16 %v1018, %v993
        %v1394 = vpack.c.b16 %v1019, %v994
        %v1395 = vpack.c.b16 %v1045, %v1020
        %v1396 = vpack.c.b16 %v1046, %v1021
        %v1397 = vpack.c.b16 %v1047, %v1022
        %v1398 = vpack.c.b16 %v1048, %v1023
        %v1399 = vpack.c.b16 %v1049, %v1024
        %v1400 = vpack.c.b16 %v1050, %v1025
        %v1401 = vpack.c.b16 %v1051, %v1026
        %v1402 = vpack.c.b16 %v1052, %v1027
        %v1403 = vpack.c.b16 %v1053, %v1028
        %v1404 = vpack.c.b16 %v1054, %v1029
        %v1405 = vpack.c.b16 %v1055, %v1030
        %v1406 = vpack.c.b16 %v1056, %v1031
        %v1407 = vpack.c.b16 %v1057, %v1032
        %v1408 = vpack.c.b16 %v1058, %v1033
        %v1409 = vpack.c.b16 %v1059, %v1034
        %v1410 = vpack.c.b16 %v1060, %v1035
        %v1411 = vpack.c.b16 %v1061, %v1036
        %v1412 = vpack.c.b16 %v1062, %v1037
        %v1413 = vpack.c.b16 %v1063, %v1038
        %v1414 = vpack.c.b16 %v1064, %v1039
        %v1415 = vpack.c.b16 %v1065, %v1040
        %v1416 = vpack.c.b16 %v1066, %v1041
        %v1417 = vpack.c.b16 %v1067, %v1042
        %v1418 = vpack.c.b16 %v1068, %v1043
        %v1419 = vpack.c.b16 %v1069, %v1044
        %v1420 = vpack.c.b16 %v1095, %v1070
        %v1421 = vpack.c.b16 %v1096, %v1071
        %v1422 = vpack.c.b16 %v1097, %v1072
        %v1423 = vpack.c.b16 %v1098, %v1073
        %v1424 = vpack.c.b16 %v1099, %v1074
        %v1425 = vpack.c.b16 %v1100, %v1075
        %v1426 = vpack.c.b16 %v1101, %v1076
        %v1427 = vpack.c.b16 %v1102, %v1077
        %v1428 = vpack.c.b16 %v1103, %v1078
        %v1429 = vpack.c.b16 %v1104, %v1079
        %v1430 = vpack.c.b16 %v1105, %v1080
        %v1431 = vpack.c.b16 %v1106, %v1081
        %v1432 = vpack.c.b16 %v1107, %v1082
        %v1433 = vpack.c.b16 %v1108, %v1083
        %v1434 = vpack.c.b16 %v1109, %v1084
        %v1435 = vpack.c.b16 %v1110, %v1085
        %v1436 = vpack.c.b16 %v1111, %v1086
        %v1437 = vpack.c.b16 %v1112, %v1087
        %v1438 = vpack.c.b16 %v1113, %v1088
        %v1439 = vpack.c.b16 %v1114, %v1089
        %v1440 = vpack.c.b16 %v1115, %v1090
        %v1441 = vpack.c.b16 %v1116, %v1091
        %v1442 = vpack.c.b16 %v1117, %v1092
        %v1443 = vpack.c.b16 %v1118, %v1093
        %v1444 = vpack.c.b16 %v1119, %v1094
        %v1445 = vpack.c.b16 %v1145, %v1120
        %v1446 = vpack.c.b16 %v1146, %v1121
        %v1447 = vpack.c.b16 %v1147, %v1122
        %v1448 = vpack.c.b16 %v1148, %v1123
        %v1449 = vpack.c.b16 %v1149, %v1124
        %v1450 = vpack.c.b16 %v1150, %v1125
        %v1451 = vpack.c.b16 %v1151, %v1126
        %v1452 = vpack.c.b16 %v1152, %v1127
        %v1453 = vpack.c.b16 %v1153, %v1128
        %v1454 = vpack.c.b16 %v1154, %v1129
        %v1455 = vpack.c.b16 %v1155, %v1130
        %v1456 = vpack.c.b16 %v1156, %v1131
        %v1457 = vpack.c.b16 %v1157, %v1132
        %v1458 = vpack.c.b16 %v1158, %v1133
        %v1459 = vpack.c.b16 %v1159, %v1134
        %v1460 = vpack.c.b16 %v1160, %v1135
        %v1461 = vpack.c.b16 %v1161, %v1136
        %v1462 = vpack.c.b16 %v1162, %v1137
        %v1463 = vpack.c.b16 %v1163, %v1138
        %v1464 = vpack.c.b16 %v1164, %v1139
        %v1465 = vpack.c.b16 %v1165, %v1140
        %v1466 = vpack.c.b16 %v1166, %v1141
        %v1467 = vpack.c.b16 %v1167, %v1142
        %v1468 = vpack.c.b16 %v1168, %v1143
        %v1469 = vpack.c.b16 %v1169, %v1144
        %v1470 = vpack.c.b16 %v1195, %v1170
        %v1471 = vpack.c.b16 %v1196, %v1171
        %v1472 = vpack.c.b16 %v1197, %v1172
        %v1473 = vpack.c.b16 %v1198, %v1173
        %v1474 = vpack.c.b16 %v1199, %v1174
        %v1475 = vpack.c.b16 %v1200, %v1175
        %v1476 = vpack.c.b16 %v1201, %v1176
        %v1477 = vpack.c.b16 %v1202, %v1177
        %v1478 = vpack.c.b16 %v1203, %v1178
        %v1479 = vpack.c.b16 %v1204, %v1179
        %v1480 = vpack.c.b16 %v1205, %v1180
        %v1481 = vpack.c.b16 %v1206, %v1181
        %v1482 = vpack.c.b16 %v1207, %v1182
        %v1483 = vpack.c.b16 %v1208, %v1183
        %v1484 = vpack.c.b16 %v1209, %v1184
        %v1485 = vpack.c.b16 %v1210, %v1185
        %v1486 = vpack.c.b16 %v1211, %v1186
        %v1487 = vpack.c.b16 %v1212, %v1187
        %v1488 = vpack.c.b16 %v1213, %v1188
        %v1489 = vpack.c.b16 %v1214, %v1189
        %v1490 = vpack.c.b16 %v1215, %v1190
        %v1491 = vpack.c.b16 %v1216, %v1191
        %v1492 = vpack.c.b16 %v1217, %v1192
        %v1493 = vpack.c.b16 %v1218, %v1193
        %v1494 = vpack.c.b16 %v1219, %v1194
        %v1495 = vpack.c.b16 %v1245, %v1220
        %v1496 = vpack.c.b16 %v1246, %v1221
        %v1497 = vpack.c.b16 %v1247, %v1222
        %v1498 = vpack.c.b16 %v1248, %v1223
        %v1499 = vpack.c.b16 %v1249, %v1224
        %v1500 = vpack.c.b16 %v1250, %v1225
        %v1501 = vpack.c.b16 %v1251, %v1226
        %v1502 = vpack.c.b16 %v1252, %v1227
        %v1503 = vpack.c.b16 %v1253, %v1228
        %v1504 = vpack.c.b16 %v1254, %v1229
        %v1505 = vpack.c.b16 %v1255, %v1230
        %v1506 = vpack.c.b16 %v1256, %v1231
        %v1507 = vpack.c.b16 %v1257, %v1232
        %v1508 = vpack.c.b16 %v1258, %v1233
        %v1509 = vpack.c.b16 %v1259, %v1234
        %v1510 = vpack.c.b16 %v1260, %v1235
        %v1511 = vpack.c.b16 %v1261, %v1236
        %v1512 = vpack.c.b16 %v1262, %v1237
        %v1513 = vpack.c.b16 %v1263, %v1238
        %v1514 = vpack.c.b16 %v1264, %v1239
        %v1515 = vpack.c.b16 %v1265, %v1240
        %v1516 = vpack.c.b16 %v1266, %v1241
        %v1517 = vpack.c.b16 %v1267, %v1242
        %v1518 = vpack.c.b16 %v1268, %v1243
        %v1519 = vpack.c.b16 %v1269, %v1244
        %vm1770 = vcmask 261120
        %v1772 = vsel %vm1770, %v509, 0
        %1774 = vmatpush.bf16.msra.mxu0 %v1445
        %1775 = vmatpush.bf16.msra.mxu0 %v1420
        %1776 = vmatpush.bf16.msra.mxu0 %v1395
        %1777 = vmatpush.bf16.msra.mxu0 %v1370
        %1778 = vmatpush.bf16.msra.mxu0 %v1345
        %1779 = vmatpush.bf16.msra.mxu0 %v1320
        %1780 = vmatpush.bf16.msra.mxu0 %v1295
        %1781 = vmatpush.bf16.msra.mxu0 %v1270
        %1782 = vmatmul.bf16.gmra.mxu0 %v508
        %v1783 = vpop.f32.mrf.mxu0
        %v1784 = vadd.f32 0.0, %v1783
        %v1785 = vpop.f32.mrf.mxu0
        %1786 = vdwg.mxu0
        %1787 = vmatpush.bf16.msra.mxu0 0
        %1788 = vmatpush.bf16.msra.mxu0 0
        %1789 = vmatpush.bf16.msra.mxu0 0
        %1790 = vmatpush.bf16.msra.mxu0 0
        %1791 = vmatpush.bf16.msra.mxu0 0
        %1792 = vmatpush.bf16.msra.mxu0 0
        %1793 = vmatpush.bf16.msra.mxu0 %v1495
        %1794 = vmatpush.bf16.msra.mxu0 %v1470
        %1795 = vmatmul.bf16.gmra.mxu0 %v1772
        %v1796 = vpop.f32.mrf.mxu0
        %v1797 = vadd.f32 %v1784, %v1796
        %v1798 = vpop.f32.mrf.mxu0
        %1799 = vdwg.mxu0
        %1800 = vmatpush.bf16.msra.mxu0 %v1446
        %1801 = vmatpush.bf16.msra.mxu0 %v1421
        %1802 = vmatpush.bf16.msra.mxu0 %v1396
        %1803 = vmatpush.bf16.msra.mxu0 %v1371
        %1804 = vmatpush.bf16.msra.mxu0 %v1346
        %1805 = vmatpush.bf16.msra.mxu0 %v1321
        %1806 = vmatpush.bf16.msra.mxu0 %v1296
        %1807 = vmatpush.bf16.msra.mxu0 %v1271
        %1808 = vmatmul.bf16.gmra.mxu0 %v508
        %v1809 = vpop.f32.mrf.mxu0
        %v1810 = vadd.f32 0.0, %v1809
        %v1811 = vpop.f32.mrf.mxu0
        %1812 = vdwg.mxu0
        %1813 = vmatpush.bf16.msra.mxu0 0
        %1814 = vmatpush.bf16.msra.mxu0 0
        %1815 = vmatpush.bf16.msra.mxu0 0
        %1816 = vmatpush.bf16.msra.mxu0 0
        %1817 = vmatpush.bf16.msra.mxu0 0
        %1818 = vmatpush.bf16.msra.mxu0 0
        %1819 = vmatpush.bf16.msra.mxu0 %v1496
        %1820 = vmatpush.bf16.msra.mxu0 %v1471
        %1821 = vmatmul.bf16.gmra.mxu0 %v1772
        %v1822 = vpop.f32.mrf.mxu0
        %v1823 = vadd.f32 %v1810, %v1822
        %v1824 = vpop.f32.mrf.mxu0
        %1825 = vdwg.mxu0
        %1826 = vmatpush.bf16.msra.mxu0 %v1447
        %1827 = vmatpush.bf16.msra.mxu0 %v1422
        %1828 = vmatpush.bf16.msra.mxu0 %v1397
        %1829 = vmatpush.bf16.msra.mxu0 %v1372
        %1830 = vmatpush.bf16.msra.mxu0 %v1347
        %1831 = vmatpush.bf16.msra.mxu0 %v1322
        %1832 = vmatpush.bf16.msra.mxu0 %v1297
        %1833 = vmatpush.bf16.msra.mxu0 %v1272
        %1834 = vmatmul.bf16.gmra.mxu0 %v508
        %v1835 = vpop.f32.mrf.mxu0
        %v1836 = vadd.f32 0.0, %v1835
        %v1837 = vpop.f32.mrf.mxu0
        %1838 = vdwg.mxu0
        %1839 = vmatpush.bf16.msra.mxu0 0
        %1840 = vmatpush.bf16.msra.mxu0 0
        %1841 = vmatpush.bf16.msra.mxu0 0
        %1842 = vmatpush.bf16.msra.mxu0 0
        %1843 = vmatpush.bf16.msra.mxu0 0
        %1844 = vmatpush.bf16.msra.mxu0 0
        %1845 = vmatpush.bf16.msra.mxu0 %v1497
        %1846 = vmatpush.bf16.msra.mxu0 %v1472
        %1847 = vmatmul.bf16.gmra.mxu0 %v1772
        %v1848 = vpop.f32.mrf.mxu0
        %v1849 = vadd.f32 %v1836, %v1848
        %v1850 = vpop.f32.mrf.mxu0
        %1851 = vdwg.mxu0
        %1852 = vmatpush.bf16.msra.mxu0 %v1448
        %1853 = vmatpush.bf16.msra.mxu0 %v1423
        %1854 = vmatpush.bf16.msra.mxu0 %v1398
        %1855 = vmatpush.bf16.msra.mxu0 %v1373
        %1856 = vmatpush.bf16.msra.mxu0 %v1348
        %1857 = vmatpush.bf16.msra.mxu0 %v1323
        %1858 = vmatpush.bf16.msra.mxu0 %v1298
        %1859 = vmatpush.bf16.msra.mxu0 %v1273
        %1860 = vmatmul.bf16.gmra.mxu0 %v508
        %v1861 = vpop.f32.mrf.mxu0
        %v1862 = vadd.f32 0.0, %v1861
        %v1863 = vpop.f32.mrf.mxu0
        %1864 = vdwg.mxu0
        %1865 = vmatpush.bf16.msra.mxu0 0
        %1866 = vmatpush.bf16.msra.mxu0 0
        %1867 = vmatpush.bf16.msra.mxu0 0
        %1868 = vmatpush.bf16.msra.mxu0 0
        %1869 = vmatpush.bf16.msra.mxu0 0
        %1870 = vmatpush.bf16.msra.mxu0 0
        %1871 = vmatpush.bf16.msra.mxu0 %v1498
        %1872 = vmatpush.bf16.msra.mxu0 %v1473
        %1873 = vmatmul.bf16.gmra.mxu0 %v1772
        %v1874 = vpop.f32.mrf.mxu0
        %v1875 = vadd.f32 %v1862, %v1874
        %v1876 = vpop.f32.mrf.mxu0
        %1877 = vdwg.mxu0
        %1878 = vmatpush.bf16.msra.mxu0 %v1449
        %1879 = vmatpush.bf16.msra.mxu0 %v1424
        %1880 = vmatpush.bf16.msra.mxu0 %v1399
        %1881 = vmatpush.bf16.msra.mxu0 %v1374
        %1882 = vmatpush.bf16.msra.mxu0 %v1349
        %1883 = vmatpush.bf16.msra.mxu0 %v1324
        %1884 = vmatpush.bf16.msra.mxu0 %v1299
        %1885 = vmatpush.bf16.msra.mxu0 %v1274
        %1886 = vmatmul.bf16.gmra.mxu0 %v508
        %v1887 = vpop.f32.mrf.mxu0
        %v1888 = vadd.f32 0.0, %v1887
        %v1889 = vpop.f32.mrf.mxu0
        %1890 = vdwg.mxu0
        %1891 = vmatpush.bf16.msra.mxu0 0
        %1892 = vmatpush.bf16.msra.mxu0 0
        %1893 = vmatpush.bf16.msra.mxu0 0
        %1894 = vmatpush.bf16.msra.mxu0 0
        %1895 = vmatpush.bf16.msra.mxu0 0
        %1896 = vmatpush.bf16.msra.mxu0 0
        %1897 = vmatpush.bf16.msra.mxu0 %v1499
        %1898 = vmatpush.bf16.msra.mxu0 %v1474
        %1899 = vmatmul.bf16.gmra.mxu0 %v1772
        %v1900 = vpop.f32.mrf.mxu0
        %v1901 = vadd.f32 %v1888, %v1900
        %v1902 = vpop.f32.mrf.mxu0
        %1903 = vdwg.mxu0
        %1904 = vmatpush.bf16.msra.mxu0 %v1450
        %1905 = vmatpush.bf16.msra.mxu0 %v1425
        %1906 = vmatpush.bf16.msra.mxu0 %v1400
        %1907 = vmatpush.bf16.msra.mxu0 %v1375
        %1908 = vmatpush.bf16.msra.mxu0 %v1350
        %1909 = vmatpush.bf16.msra.mxu0 %v1325
        %1910 = vmatpush.bf16.msra.mxu0 %v1300
        %1911 = vmatpush.bf16.msra.mxu0 %v1275
        %1912 = vmatmul.bf16.gmra.mxu0 %v508
        %v1913 = vpop.f32.mrf.mxu0
        %v1914 = vadd.f32 0.0, %v1913
        %v1915 = vpop.f32.mrf.mxu0
        %1916 = vdwg.mxu0
        %1917 = vmatpush.bf16.msra.mxu0 0
        %1918 = vmatpush.bf16.msra.mxu0 0
        %1919 = vmatpush.bf16.msra.mxu0 0
        %1920 = vmatpush.bf16.msra.mxu0 0
        %1921 = vmatpush.bf16.msra.mxu0 0
        %1922 = vmatpush.bf16.msra.mxu0 0
        %1923 = vmatpush.bf16.msra.mxu0 %v1500
        %1924 = vmatpush.bf16.msra.mxu0 %v1475
        %1925 = vmatmul.bf16.gmra.mxu0 %v1772
        %v1926 = vpop.f32.mrf.mxu0
        %v1927 = vadd.f32 %v1914, %v1926
        %v1928 = vpop.f32.mrf.mxu0
        %1929 = vdwg.mxu0
        %1930 = vmatpush.bf16.msra.mxu0 %v1451
        %1931 = vmatpush.bf16.msra.mxu0 %v1426
        %1932 = vmatpush.bf16.msra.mxu0 %v1401
        %1933 = vmatpush.bf16.msra.mxu0 %v1376
        %1934 = vmatpush.bf16.msra.mxu0 %v1351
        %1935 = vmatpush.bf16.msra.mxu0 %v1326
        %1936 = vmatpush.bf16.msra.mxu0 %v1301
        %1937 = vmatpush.bf16.msra.mxu0 %v1276
        %1938 = vmatmul.bf16.gmra.mxu0 %v508
        %v1939 = vpop.f32.mrf.mxu0
        %v1940 = vadd.f32 0.0, %v1939
        %v1941 = vpop.f32.mrf.mxu0
        %1942 = vdwg.mxu0
        %1943 = vmatpush.bf16.msra.mxu0 0
        %1944 = vmatpush.bf16.msra.mxu0 0
        %1945 = vmatpush.bf16.msra.mxu0 0
        %1946 = vmatpush.bf16.msra.mxu0 0
        %1947 = vmatpush.bf16.msra.mxu0 0
        %1948 = vmatpush.bf16.msra.mxu0 0
        %1949 = vmatpush.bf16.msra.mxu0 %v1501
        %1950 = vmatpush.bf16.msra.mxu0 %v1476
        %1951 = vmatmul.bf16.gmra.mxu0 %v1772
        %v1952 = vpop.f32.mrf.mxu0
        %v1953 = vadd.f32 %v1940, %v1952
        %v1954 = vpop.f32.mrf.mxu0
        %1955 = vdwg.mxu0
        %1956 = vmatpush.bf16.msra.mxu0 %v1452
        %1957 = vmatpush.bf16.msra.mxu0 %v1427
        %1958 = vmatpush.bf16.msra.mxu0 %v1402
        %1959 = vmatpush.bf16.msra.mxu0 %v1377
        %1960 = vmatpush.bf16.msra.mxu0 %v1352
        %1961 = vmatpush.bf16.msra.mxu0 %v1327
        %1962 = vmatpush.bf16.msra.mxu0 %v1302
        %1963 = vmatpush.bf16.msra.mxu0 %v1277
        %1964 = vmatmul.bf16.gmra.mxu0 %v508
        %v1965 = vpop.f32.mrf.mxu0
        %v1966 = vadd.f32 0.0, %v1965
        %v1967 = vpop.f32.mrf.mxu0
        %1968 = vdwg.mxu0
        %1969 = vmatpush.bf16.msra.mxu0 0
        %1970 = vmatpush.bf16.msra.mxu0 0
        %1971 = vmatpush.bf16.msra.mxu0 0
        %1972 = vmatpush.bf16.msra.mxu0 0
        %1973 = vmatpush.bf16.msra.mxu0 0
        %1974 = vmatpush.bf16.msra.mxu0 0
        %1975 = vmatpush.bf16.msra.mxu0 %v1502
        %1976 = vmatpush.bf16.msra.mxu0 %v1477
        %1977 = vmatmul.bf16.gmra.mxu0 %v1772
        %v1978 = vpop.f32.mrf.mxu0
        %v1979 = vadd.f32 %v1966, %v1978
        %v1980 = vpop.f32.mrf.mxu0
        %1981 = vdwg.mxu0
        %1982 = vmatpush.bf16.msra.mxu0 %v1453
        %1983 = vmatpush.bf16.msra.mxu0 %v1428
        %1984 = vmatpush.bf16.msra.mxu0 %v1403
        %1985 = vmatpush.bf16.msra.mxu0 %v1378
        %1986 = vmatpush.bf16.msra.mxu0 %v1353
        %1987 = vmatpush.bf16.msra.mxu0 %v1328
        %1988 = vmatpush.bf16.msra.mxu0 %v1303
        %1989 = vmatpush.bf16.msra.mxu0 %v1278
        %1990 = vmatmul.bf16.gmra.mxu0 %v508
        %v1991 = vpop.f32.mrf.mxu0
        %v1992 = vadd.f32 0.0, %v1991
        %v1993 = vpop.f32.mrf.mxu0
        %1994 = vdwg.mxu0
        %1995 = vmatpush.bf16.msra.mxu0 0
        %1996 = vmatpush.bf16.msra.mxu0 0
        %1997 = vmatpush.bf16.msra.mxu0 0
        %1998 = vmatpush.bf16.msra.mxu0 0
        %1999 = vmatpush.bf16.msra.mxu0 0
        %2000 = vmatpush.bf16.msra.mxu0 0
        %2001 = vmatpush.bf16.msra.mxu0 %v1503
        %2002 = vmatpush.bf16.msra.mxu0 %v1478
        %2003 = vmatmul.bf16.gmra.mxu0 %v1772
        %v2004 = vpop.f32.mrf.mxu0
        %v2005 = vadd.f32 %v1992, %v2004
        %v2006 = vpop.f32.mrf.mxu0
        %2007 = vdwg.mxu0
        %2008 = vmatpush.bf16.msra.mxu0 %v1454
        %2009 = vmatpush.bf16.msra.mxu0 %v1429
        %2010 = vmatpush.bf16.msra.mxu0 %v1404
        %2011 = vmatpush.bf16.msra.mxu0 %v1379
        %2012 = vmatpush.bf16.msra.mxu0 %v1354
        %2013 = vmatpush.bf16.msra.mxu0 %v1329
        %2014 = vmatpush.bf16.msra.mxu0 %v1304
        %2015 = vmatpush.bf16.msra.mxu0 %v1279
        %2016 = vmatmul.bf16.gmra.mxu0 %v508
        %v2017 = vpop.f32.mrf.mxu0
        %v2018 = vadd.f32 0.0, %v2017
        %v2019 = vpop.f32.mrf.mxu0
        %2020 = vdwg.mxu0
        %2021 = vmatpush.bf16.msra.mxu0 0
        %2022 = vmatpush.bf16.msra.mxu0 0
        %2023 = vmatpush.bf16.msra.mxu0 0
        %2024 = vmatpush.bf16.msra.mxu0 0
        %2025 = vmatpush.bf16.msra.mxu0 0
        %2026 = vmatpush.bf16.msra.mxu0 0
        %2027 = vmatpush.bf16.msra.mxu0 %v1504
        %2028 = vmatpush.bf16.msra.mxu0 %v1479
        %2029 = vmatmul.bf16.gmra.mxu0 %v1772
        %v2030 = vpop.f32.mrf.mxu0
        %v2031 = vadd.f32 %v2018, %v2030
        %v2032 = vpop.f32.mrf.mxu0
        %2033 = vdwg.mxu0
        %2034 = vmatpush.bf16.msra.mxu0 %v1455
        %2035 = vmatpush.bf16.msra.mxu0 %v1430
        %2036 = vmatpush.bf16.msra.mxu0 %v1405
        %2037 = vmatpush.bf16.msra.mxu0 %v1380
        %2038 = vmatpush.bf16.msra.mxu0 %v1355
        %2039 = vmatpush.bf16.msra.mxu0 %v1330
        %2040 = vmatpush.bf16.msra.mxu0 %v1305
        %2041 = vmatpush.bf16.msra.mxu0 %v1280
        %2042 = vmatmul.bf16.gmra.mxu0 %v508
        %v2043 = vpop.f32.mrf.mxu0
        %v2044 = vadd.f32 0.0, %v2043
        %v2045 = vpop.f32.mrf.mxu0
        %2046 = vdwg.mxu0
        %2047 = vmatpush.bf16.msra.mxu0 0
        %2048 = vmatpush.bf16.msra.mxu0 0
        %2049 = vmatpush.bf16.msra.mxu0 0
        %2050 = vmatpush.bf16.msra.mxu0 0
        %2051 = vmatpush.bf16.msra.mxu0 0
        %2052 = vmatpush.bf16.msra.mxu0 0
        %2053 = vmatpush.bf16.msra.mxu0 %v1505
        %2054 = vmatpush.bf16.msra.mxu0 %v1480
        %2055 = vmatmul.bf16.gmra.mxu0 %v1772
        %v2056 = vpop.f32.mrf.mxu0
        %v2057 = vadd.f32 %v2044, %v2056
        %v2058 = vpop.f32.mrf.mxu0
        %2059 = vdwg.mxu0
        %2060 = vmatpush.bf16.msra.mxu0 %v1456
        %2061 = vmatpush.bf16.msra.mxu0 %v1431
        %2062 = vmatpush.bf16.msra.mxu0 %v1406
        %2063 = vmatpush.bf16.msra.mxu0 %v1381
        %2064 = vmatpush.bf16.msra.mxu0 %v1356
        %2065 = vmatpush.bf16.msra.mxu0 %v1331
        %2066 = vmatpush.bf16.msra.mxu0 %v1306
        %2067 = vmatpush.bf16.msra.mxu0 %v1281
        %2068 = vmatmul.bf16.gmra.mxu0 %v508
        %v2069 = vpop.f32.mrf.mxu0
        %v2070 = vadd.f32 0.0, %v2069
        %v2071 = vpop.f32.mrf.mxu0
        %2072 = vdwg.mxu0
        %2073 = vmatpush.bf16.msra.mxu0 0
        %2074 = vmatpush.bf16.msra.mxu0 0
        %2075 = vmatpush.bf16.msra.mxu0 0
        %2076 = vmatpush.bf16.msra.mxu0 0
        %2077 = vmatpush.bf16.msra.mxu0 0
        %2078 = vmatpush.bf16.msra.mxu0 0
        %2079 = vmatpush.bf16.msra.mxu0 %v1506
        %2080 = vmatpush.bf16.msra.mxu0 %v1481
        %2081 = vmatmul.bf16.gmra.mxu0 %v1772
        %v2082 = vpop.f32.mrf.mxu0
        %v2083 = vadd.f32 %v2070, %v2082
        %v2084 = vpop.f32.mrf.mxu0
        %2085 = vdwg.mxu0
        %2086 = vmatpush.bf16.msra.mxu0 %v1457
        %2087 = vmatpush.bf16.msra.mxu0 %v1432
        %2088 = vmatpush.bf16.msra.mxu0 %v1407
        %2089 = vmatpush.bf16.msra.mxu0 %v1382
        %2090 = vmatpush.bf16.msra.mxu0 %v1357
        %2091 = vmatpush.bf16.msra.mxu0 %v1332
        %2092 = vmatpush.bf16.msra.mxu0 %v1307
        %2093 = vmatpush.bf16.msra.mxu0 %v1282
        %2094 = vmatmul.bf16.gmra.mxu0 %v508
        %v2095 = vpop.f32.mrf.mxu0
        %v2096 = vadd.f32 0.0, %v2095
        %v2097 = vpop.f32.mrf.mxu0
        %2098 = vdwg.mxu0
        %2099 = vmatpush.bf16.msra.mxu0 0
        %2100 = vmatpush.bf16.msra.mxu0 0
        %2101 = vmatpush.bf16.msra.mxu0 0
        %2102 = vmatpush.bf16.msra.mxu0 0
        %2103 = vmatpush.bf16.msra.mxu0 0
        %2104 = vmatpush.bf16.msra.mxu0 0
        %2105 = vmatpush.bf16.msra.mxu0 %v1507
        %2106 = vmatpush.bf16.msra.mxu0 %v1482
        %2107 = vmatmul.bf16.gmra.mxu0 %v1772
        %v2108 = vpop.f32.mrf.mxu0
        %v2109 = vadd.f32 %v2096, %v2108
        %v2110 = vpop.f32.mrf.mxu0
        %2111 = vdwg.mxu0
        %2112 = vmatpush.bf16.msra.mxu0 %v1458
        %2113 = vmatpush.bf16.msra.mxu0 %v1433
        %2114 = vmatpush.bf16.msra.mxu0 %v1408
        %2115 = vmatpush.bf16.msra.mxu0 %v1383
        %2116 = vmatpush.bf16.msra.mxu0 %v1358
        %2117 = vmatpush.bf16.msra.mxu0 %v1333
        %2118 = vmatpush.bf16.msra.mxu0 %v1308
        %2119 = vmatpush.bf16.msra.mxu0 %v1283
        %2120 = vmatmul.bf16.gmra.mxu0 %v508
        %v2121 = vpop.f32.mrf.mxu0
        %v2122 = vadd.f32 0.0, %v2121
        %v2123 = vpop.f32.mrf.mxu0
        %2124 = vdwg.mxu0
        %2125 = vmatpush.bf16.msra.mxu0 0
        %2126 = vmatpush.bf16.msra.mxu0 0
        %2127 = vmatpush.bf16.msra.mxu0 0
        %2128 = vmatpush.bf16.msra.mxu0 0
        %2129 = vmatpush.bf16.msra.mxu0 0
        %2130 = vmatpush.bf16.msra.mxu0 0
        %2131 = vmatpush.bf16.msra.mxu0 %v1508
        %2132 = vmatpush.bf16.msra.mxu0 %v1483
        %2133 = vmatmul.bf16.gmra.mxu0 %v1772
        %v2134 = vpop.f32.mrf.mxu0
        %v2135 = vadd.f32 %v2122, %v2134
        %v2136 = vpop.f32.mrf.mxu0
        %2137 = vdwg.mxu0
        %2138 = vmatpush.bf16.msra.mxu0 %v1459
        %2139 = vmatpush.bf16.msra.mxu0 %v1434
        %2140 = vmatpush.bf16.msra.mxu0 %v1409
        %2141 = vmatpush.bf16.msra.mxu0 %v1384
        %2142 = vmatpush.bf16.msra.mxu0 %v1359
        %2143 = vmatpush.bf16.msra.mxu0 %v1334
        %2144 = vmatpush.bf16.msra.mxu0 %v1309
        %2145 = vmatpush.bf16.msra.mxu0 %v1284
        %2146 = vmatmul.bf16.gmra.mxu0 %v508
        %v2147 = vpop.f32.mrf.mxu0
        %v2148 = vadd.f32 0.0, %v2147
        %v2149 = vpop.f32.mrf.mxu0
        %2150 = vdwg.mxu0
        %2151 = vmatpush.bf16.msra.mxu0 0
        %2152 = vmatpush.bf16.msra.mxu0 0
        %2153 = vmatpush.bf16.msra.mxu0 0
        %2154 = vmatpush.bf16.msra.mxu0 0
        %2155 = vmatpush.bf16.msra.mxu0 0
        %2156 = vmatpush.bf16.msra.mxu0 0
        %2157 = vmatpush.bf16.msra.mxu0 %v1509
        %2158 = vmatpush.bf16.msra.mxu0 %v1484
        %2159 = vmatmul.bf16.gmra.mxu0 %v1772
        %v2160 = vpop.f32.mrf.mxu0
        %v2161 = vadd.f32 %v2148, %v2160
        %v2162 = vpop.f32.mrf.mxu0
        %2163 = vdwg.mxu0
        %2164 = vmatpush.bf16.msra.mxu0 %v1460
        %2165 = vmatpush.bf16.msra.mxu0 %v1435
        %2166 = vmatpush.bf16.msra.mxu0 %v1410
        %2167 = vmatpush.bf16.msra.mxu0 %v1385
        %2168 = vmatpush.bf16.msra.mxu0 %v1360
        %2169 = vmatpush.bf16.msra.mxu0 %v1335
        %2170 = vmatpush.bf16.msra.mxu0 %v1310
        %2171 = vmatpush.bf16.msra.mxu0 %v1285
        %2172 = vmatmul.bf16.gmra.mxu0 %v508
        %v2173 = vpop.f32.mrf.mxu0
        %v2174 = vadd.f32 0.0, %v2173
        %v2175 = vpop.f32.mrf.mxu0
        %2176 = vdwg.mxu0
        %2177 = vmatpush.bf16.msra.mxu0 0
        %2178 = vmatpush.bf16.msra.mxu0 0
        %2179 = vmatpush.bf16.msra.mxu0 0
        %2180 = vmatpush.bf16.msra.mxu0 0
        %2181 = vmatpush.bf16.msra.mxu0 0
        %2182 = vmatpush.bf16.msra.mxu0 0
        %2183 = vmatpush.bf16.msra.mxu0 %v1510
        %2184 = vmatpush.bf16.msra.mxu0 %v1485
        %2185 = vmatmul.bf16.gmra.mxu0 %v1772
        %v2186 = vpop.f32.mrf.mxu0
        %v2187 = vadd.f32 %v2174, %v2186
        %v2188 = vpop.f32.mrf.mxu0
        %2189 = vdwg.mxu0
        %2190 = vmatpush.bf16.msra.mxu0 %v1461
        %2191 = vmatpush.bf16.msra.mxu0 %v1436
        %2192 = vmatpush.bf16.msra.mxu0 %v1411
        %2193 = vmatpush.bf16.msra.mxu0 %v1386
        %2194 = vmatpush.bf16.msra.mxu0 %v1361
        %2195 = vmatpush.bf16.msra.mxu0 %v1336
        %2196 = vmatpush.bf16.msra.mxu0 %v1311
        %2197 = vmatpush.bf16.msra.mxu0 %v1286
        %2198 = vmatmul.bf16.gmra.mxu0 %v508
        %v2199 = vpop.f32.mrf.mxu0
        %v2200 = vadd.f32 0.0, %v2199
        %v2201 = vpop.f32.mrf.mxu0
        %2202 = vdwg.mxu0
        %2203 = vmatpush.bf16.msra.mxu0 0
        %2204 = vmatpush.bf16.msra.mxu0 0
        %2205 = vmatpush.bf16.msra.mxu0 0
        %2206 = vmatpush.bf16.msra.mxu0 0
        %2207 = vmatpush.bf16.msra.mxu0 0
        %2208 = vmatpush.bf16.msra.mxu0 0
        %2209 = vmatpush.bf16.msra.mxu0 %v1511
        %2210 = vmatpush.bf16.msra.mxu0 %v1486
        %2211 = vmatmul.bf16.gmra.mxu0 %v1772
        %v2212 = vpop.f32.mrf.mxu0
        %v2213 = vadd.f32 %v2200, %v2212
        %v2214 = vpop.f32.mrf.mxu0
        %2215 = vdwg.mxu0
        %2216 = vmatpush.bf16.msra.mxu0 %v1462
        %2217 = vmatpush.bf16.msra.mxu0 %v1437
        %2218 = vmatpush.bf16.msra.mxu0 %v1412
        %2219 = vmatpush.bf16.msra.mxu0 %v1387
        %2220 = vmatpush.bf16.msra.mxu0 %v1362
        %2221 = vmatpush.bf16.msra.mxu0 %v1337
        %2222 = vmatpush.bf16.msra.mxu0 %v1312
        %2223 = vmatpush.bf16.msra.mxu0 %v1287
        %2224 = vmatmul.bf16.gmra.mxu0 %v508
        %v2225 = vpop.f32.mrf.mxu0
        %v2226 = vadd.f32 0.0, %v2225
        %v2227 = vpop.f32.mrf.mxu0
        %2228 = vdwg.mxu0
        %2229 = vmatpush.bf16.msra.mxu0 0
        %2230 = vmatpush.bf16.msra.mxu0 0
        %2231 = vmatpush.bf16.msra.mxu0 0
        %2232 = vmatpush.bf16.msra.mxu0 0
        %2233 = vmatpush.bf16.msra.mxu0 0
        %2234 = vmatpush.bf16.msra.mxu0 0
        %2235 = vmatpush.bf16.msra.mxu0 %v1512
        %2236 = vmatpush.bf16.msra.mxu0 %v1487
        %2237 = vmatmul.bf16.gmra.mxu0 %v1772
        %v2238 = vpop.f32.mrf.mxu0
        %v2239 = vadd.f32 %v2226, %v2238
        %v2240 = vpop.f32.mrf.mxu0
        %2241 = vdwg.mxu0
        %2242 = vmatpush.bf16.msra.mxu0 %v1463
        %2243 = vmatpush.bf16.msra.mxu0 %v1438
        %2244 = vmatpush.bf16.msra.mxu0 %v1413
        %2245 = vmatpush.bf16.msra.mxu0 %v1388
        %2246 = vmatpush.bf16.msra.mxu0 %v1363
        %2247 = vmatpush.bf16.msra.mxu0 %v1338
        %2248 = vmatpush.bf16.msra.mxu0 %v1313
        %2249 = vmatpush.bf16.msra.mxu0 %v1288
        %2250 = vmatmul.bf16.gmra.mxu0 %v508
        %v2251 = vpop.f32.mrf.mxu0
        %v2252 = vadd.f32 0.0, %v2251
        %v2253 = vpop.f32.mrf.mxu0
        %2254 = vdwg.mxu0
        %2255 = vmatpush.bf16.msra.mxu0 0
        %2256 = vmatpush.bf16.msra.mxu0 0
        %2257 = vmatpush.bf16.msra.mxu0 0
        %2258 = vmatpush.bf16.msra.mxu0 0
        %2259 = vmatpush.bf16.msra.mxu0 0
        %2260 = vmatpush.bf16.msra.mxu0 0
        %2261 = vmatpush.bf16.msra.mxu0 %v1513
        %2262 = vmatpush.bf16.msra.mxu0 %v1488
        %2263 = vmatmul.bf16.gmra.mxu0 %v1772
        %v2264 = vpop.f32.mrf.mxu0
        %v2265 = vadd.f32 %v2252, %v2264
        %v2266 = vpop.f32.mrf.mxu0
        %2267 = vdwg.mxu0
        %2268 = vmatpush.bf16.msra.mxu0 %v1464
        %2269 = vmatpush.bf16.msra.mxu0 %v1439
        %2270 = vmatpush.bf16.msra.mxu0 %v1414
        %2271 = vmatpush.bf16.msra.mxu0 %v1389
        %2272 = vmatpush.bf16.msra.mxu0 %v1364
        %2273 = vmatpush.bf16.msra.mxu0 %v1339
        %2274 = vmatpush.bf16.msra.mxu0 %v1314
        %2275 = vmatpush.bf16.msra.mxu0 %v1289
        %2276 = vmatmul.bf16.gmra.mxu0 %v508
        %v2277 = vpop.f32.mrf.mxu0
        %v2278 = vadd.f32 0.0, %v2277
        %v2279 = vpop.f32.mrf.mxu0
        %2280 = vdwg.mxu0
        %2281 = vmatpush.bf16.msra.mxu0 0
        %2282 = vmatpush.bf16.msra.mxu0 0
        %2283 = vmatpush.bf16.msra.mxu0 0
        %2284 = vmatpush.bf16.msra.mxu0 0
        %2285 = vmatpush.bf16.msra.mxu0 0
        %2286 = vmatpush.bf16.msra.mxu0 0
        %2287 = vmatpush.bf16.msra.mxu0 %v1514
        %2288 = vmatpush.bf16.msra.mxu0 %v1489
        %2289 = vmatmul.bf16.gmra.mxu0 %v1772
        %v2290 = vpop.f32.mrf.mxu0
        %v2291 = vadd.f32 %v2278, %v2290
        %v2292 = vpop.f32.mrf.mxu0
        %2293 = vdwg.mxu0
        %2294 = vmatpush.bf16.msra.mxu0 %v1465
        %2295 = vmatpush.bf16.msra.mxu0 %v1440
        %2296 = vmatpush.bf16.msra.mxu0 %v1415
        %2297 = vmatpush.bf16.msra.mxu0 %v1390
        %2298 = vmatpush.bf16.msra.mxu0 %v1365
        %2299 = vmatpush.bf16.msra.mxu0 %v1340
        %2300 = vmatpush.bf16.msra.mxu0 %v1315
        %2301 = vmatpush.bf16.msra.mxu0 %v1290
        %2302 = vmatmul.bf16.gmra.mxu0 %v508
        %v2303 = vpop.f32.mrf.mxu0
        %v2304 = vadd.f32 0.0, %v2303
        %v2305 = vpop.f32.mrf.mxu0
        %2306 = vdwg.mxu0
        %2307 = vmatpush.bf16.msra.mxu0 0
        %2308 = vmatpush.bf16.msra.mxu0 0
        %2309 = vmatpush.bf16.msra.mxu0 0
        %2310 = vmatpush.bf16.msra.mxu0 0
        %2311 = vmatpush.bf16.msra.mxu0 0
        %2312 = vmatpush.bf16.msra.mxu0 0
        %2313 = vmatpush.bf16.msra.mxu0 %v1515
        %2314 = vmatpush.bf16.msra.mxu0 %v1490
        %2315 = vmatmul.bf16.gmra.mxu0 %v1772
        %v2316 = vpop.f32.mrf.mxu0
        %v2317 = vadd.f32 %v2304, %v2316
        %v2318 = vpop.f32.mrf.mxu0
        %2319 = vdwg.mxu0
        %2320 = vmatpush.bf16.msra.mxu0 %v1466
        %2321 = vmatpush.bf16.msra.mxu0 %v1441
        %2322 = vmatpush.bf16.msra.mxu0 %v1416
        %2323 = vmatpush.bf16.msra.mxu0 %v1391
        %2324 = vmatpush.bf16.msra.mxu0 %v1366
        %2325 = vmatpush.bf16.msra.mxu0 %v1341
        %2326 = vmatpush.bf16.msra.mxu0 %v1316
        %2327 = vmatpush.bf16.msra.mxu0 %v1291
        %2328 = vmatmul.bf16.gmra.mxu0 %v508
        %v2329 = vpop.f32.mrf.mxu0
        %v2330 = vadd.f32 0.0, %v2329
        %v2331 = vpop.f32.mrf.mxu0
        %2332 = vdwg.mxu0
        %2333 = vmatpush.bf16.msra.mxu0 0
        %2334 = vmatpush.bf16.msra.mxu0 0
        %2335 = vmatpush.bf16.msra.mxu0 0
        %2336 = vmatpush.bf16.msra.mxu0 0
        %2337 = vmatpush.bf16.msra.mxu0 0
        %2338 = vmatpush.bf16.msra.mxu0 0
        %2339 = vmatpush.bf16.msra.mxu0 %v1516
        %2340 = vmatpush.bf16.msra.mxu0 %v1491
        %2341 = vmatmul.bf16.gmra.mxu0 %v1772
        %v2342 = vpop.f32.mrf.mxu0
        %v2343 = vadd.f32 %v2330, %v2342
        %v2344 = vpop.f32.mrf.mxu0
        %2345 = vdwg.mxu0
        %2346 = vmatpush.bf16.msra.mxu0 %v1467
        %2347 = vmatpush.bf16.msra.mxu0 %v1442
        %2348 = vmatpush.bf16.msra.mxu0 %v1417
        %2349 = vmatpush.bf16.msra.mxu0 %v1392
        %2350 = vmatpush.bf16.msra.mxu0 %v1367
        %2351 = vmatpush.bf16.msra.mxu0 %v1342
        %2352 = vmatpush.bf16.msra.mxu0 %v1317
        %2353 = vmatpush.bf16.msra.mxu0 %v1292
        %2354 = vmatmul.bf16.gmra.mxu0 %v508
        %v2355 = vpop.f32.mrf.mxu0
        %v2356 = vadd.f32 0.0, %v2355
        %v2357 = vpop.f32.mrf.mxu0
        %2358 = vdwg.mxu0
        %2359 = vmatpush.bf16.msra.mxu0 0
        %2360 = vmatpush.bf16.msra.mxu0 0
        %2361 = vmatpush.bf16.msra.mxu0 0
        %2362 = vmatpush.bf16.msra.mxu0 0
        %2363 = vmatpush.bf16.msra.mxu0 0
        %2364 = vmatpush.bf16.msra.mxu0 0
        %2365 = vmatpush.bf16.msra.mxu0 %v1517
        %2366 = vmatpush.bf16.msra.mxu0 %v1492
        %2367 = vmatmul.bf16.gmra.mxu0 %v1772
        %v2368 = vpop.f32.mrf.mxu0
        %v2369 = vadd.f32 %v2356, %v2368
        %v2370 = vpop.f32.mrf.mxu0
        %2371 = vdwg.mxu0
        %2372 = vmatpush.bf16.msra.mxu0 %v1468
        %2373 = vmatpush.bf16.msra.mxu0 %v1443
        %2374 = vmatpush.bf16.msra.mxu0 %v1418
        %2375 = vmatpush.bf16.msra.mxu0 %v1393
        %2376 = vmatpush.bf16.msra.mxu0 %v1368
        %2377 = vmatpush.bf16.msra.mxu0 %v1343
        %2378 = vmatpush.bf16.msra.mxu0 %v1318
        %2379 = vmatpush.bf16.msra.mxu0 %v1293
        %2380 = vmatmul.bf16.gmra.mxu0 %v508
        %v2381 = vpop.f32.mrf.mxu0
        %v2382 = vadd.f32 0.0, %v2381
        %v2383 = vpop.f32.mrf.mxu0
        %2384 = vdwg.mxu0
        %2385 = vmatpush.bf16.msra.mxu0 0
        %2386 = vmatpush.bf16.msra.mxu0 0
        %2387 = vmatpush.bf16.msra.mxu0 0
        %2388 = vmatpush.bf16.msra.mxu0 0
        %2389 = vmatpush.bf16.msra.mxu0 0
        %2390 = vmatpush.bf16.msra.mxu0 0
        %2391 = vmatpush.bf16.msra.mxu0 %v1518
        %2392 = vmatpush.bf16.msra.mxu0 %v1493
        %2393 = vmatmul.bf16.gmra.mxu0 %v1772
        %v2394 = vpop.f32.mrf.mxu0
        %v2395 = vadd.f32 %v2382, %v2394
        %v2396 = vpop.f32.mrf.mxu0
        %2397 = vdwg.mxu0
        %2398 = vmatpush.bf16.msra.mxu0 %v1469
        %2399 = vmatpush.bf16.msra.mxu0 %v1444
        %2400 = vmatpush.bf16.msra.mxu0 %v1419
        %2401 = vmatpush.bf16.msra.mxu0 %v1394
        %2402 = vmatpush.bf16.msra.mxu0 %v1369
        %2403 = vmatpush.bf16.msra.mxu0 %v1344
        %2404 = vmatpush.bf16.msra.mxu0 %v1319
        %2405 = vmatpush.bf16.msra.mxu0 %v1294
        %2406 = vmatmul.bf16.gmra.mxu0 %v508
        %v2407 = vpop.f32.mrf.mxu0
        %v2408 = vadd.f32 0.0, %v2407
        %v2409 = vpop.f32.mrf.mxu0
        %2410 = vdwg.mxu0
        %2411 = vmatpush.bf16.msra.mxu0 0
        %2412 = vmatpush.bf16.msra.mxu0 0
        %2413 = vmatpush.bf16.msra.mxu0 0
        %2414 = vmatpush.bf16.msra.mxu0 0
        %2415 = vmatpush.bf16.msra.mxu0 0
        %2416 = vmatpush.bf16.msra.mxu0 0
        %2417 = vmatpush.bf16.msra.mxu0 %v1519
        %2418 = vmatpush.bf16.msra.mxu0 %v1494
        %2419 = vmatmul.bf16.gmra.mxu0 %v1772
        %v2420 = vpop.f32.mrf.mxu0
        %v2421 = vadd.f32 %v2408, %v2420
        %v2422 = vpop.f32.mrf.mxu0
        %2423 = vdwg.mxu0
        %v2424 = vld [vmem:[%s213] sm:$0xff]
        %v2425 = vld [vmem:[%s213 + $0x8] sm:$0xff]
        %v2426 = vld [vmem:[%s213 + $0x10] sm:$0xff]
        %v2427 = vld [vmem:[%s213 + $0x18] sm:$0x1]
        %v2428 = vmul.f32 %v1797, 2.0
        %v2429 = vmul.f32 %v1823, 2.0
        %v2430 = vmul.f32 %v1849, 2.0
        %v2431 = vmul.f32 %v1875, 2.0
        %v2432 = vmul.f32 %v1901, 2.0
        %v2433 = vmul.f32 %v1927, 2.0
        %v2434 = vmul.f32 %v1953, 2.0
        %v2435 = vmul.f32 %v1979, 2.0
        %v2436 = vmul.f32 %v2005, 2.0
        %v2437 = vmul.f32 %v2031, 2.0
        %v2438 = vmul.f32 %v2057, 2.0
        %v2439 = vmul.f32 %v2083, 2.0
        %v2440 = vmul.f32 %v2109, 2.0
        %v2441 = vmul.f32 %v2135, 2.0
        %v2442 = vmul.f32 %v2161, 2.0
        %v2443 = vmul.f32 %v2187, 2.0
        %v2444 = vmul.f32 %v2213, 2.0
        %v2445 = vmul.f32 %v2239, 2.0
        %v2446 = vmul.f32 %v2265, 2.0
        %v2447 = vmul.f32 %v2291, 2.0
        %v2448 = vmul.f32 %v2317, 2.0
        %v2449 = vmul.f32 %v2343, 2.0
        %v2450 = vmul.f32 %v2369, 2.0
        %v2451 = vmul.f32 %v2395, 2.0
        %v2452 = vmul.f32 %v2421, 2.0
        %v2457 = vperm.slane %v2424, 0
        %v2458 = vperm.slane %v2424, 1
        %v2459 = vperm.slane %v2424, 2
        %v2460 = vperm.slane %v2424, 3
        %v2461 = vperm.slane %v2424, 4
        %v2462 = vperm.slane %v2424, 5
        %v2463 = vperm.slane %v2424, 6
        %v2464 = vperm.slane %v2424, 7
        %v2465 = vperm.slane %v2425, 0
        %v2466 = vperm.slane %v2425, 1
        %v2467 = vperm.slane %v2425, 2
        %v2468 = vperm.slane %v2425, 3
        %v2469 = vperm.slane %v2425, 4
        %v2470 = vperm.slane %v2425, 5
        %v2471 = vperm.slane %v2425, 6
        %v2472 = vperm.slane %v2425, 7
        %v2473 = vperm.slane %v2426, 0
        %v2474 = vperm.slane %v2426, 1
        %v2475 = vperm.slane %v2426, 2
        %v2476 = vperm.slane %v2426, 3
        %v2477 = vperm.slane %v2426, 4
        %v2478 = vperm.slane %v2426, 5
        %v2479 = vperm.slane %v2426, 6
        %v2480 = vperm.slane %v2426, 7
        %v2481 = vperm.slane %v2427, 0
        %v2507 = vadd.f32 %v2428, %v2457
        %v2508 = vadd.f32 %v2429, %v2458
        %v2509 = vadd.f32 %v2430, %v2459
        %v2510 = vadd.f32 %v2431, %v2460
        %v2511 = vadd.f32 %v2432, %v2461
        %v2512 = vadd.f32 %v2433, %v2462
        %v2513 = vadd.f32 %v2434, %v2463
        %v2514 = vadd.f32 %v2435, %v2464
        %v2515 = vadd.f32 %v2436, %v2465
        %v2516 = vadd.f32 %v2437, %v2466
        %v2517 = vadd.f32 %v2438, %v2467
        %v2518 = vadd.f32 %v2439, %v2468
        %v2519 = vadd.f32 %v2440, %v2469
        %v2520 = vadd.f32 %v2441, %v2470
        %v2521 = vadd.f32 %v2442, %v2471
        %v2522 = vadd.f32 %v2443, %v2472
        %v2523 = vadd.f32 %v2444, %v2473
        %v2524 = vadd.f32 %v2445, %v2474
        %v2525 = vadd.f32 %v2446, %v2475
        %v2526 = vadd.f32 %v2447, %v2476
        %v2527 = vadd.f32 %v2448, %v2477
        %v2528 = vadd.f32 %v2449, %v2478
        %v2529 = vadd.f32 %v2450, %v2479
        %v2530 = vadd.f32 %v2451, %v2480
        %v2531 = vadd.f32 %v2452, %v2481
        %v2532 = vmax.f32 %v2507, 0.0
        %v2533 = vmax.f32 %v2508, 0.0
        %v2534 = vmax.f32 %v2509, 0.0
        %v2535 = vmax.f32 %v2510, 0.0
        %v2536 = vmax.f32 %v2511, 0.0
        %v2537 = vmax.f32 %v2512, 0.0
        %v2538 = vmax.f32 %v2513, 0.0
        %v2539 = vmax.f32 %v2514, 0.0
        %v2540 = vmax.f32 %v2515, 0.0
        %v2541 = vmax.f32 %v2516, 0.0
        %v2542 = vmax.f32 %v2517, 0.0
        %v2543 = vmax.f32 %v2518, 0.0
        %v2544 = vmax.f32 %v2519, 0.0
        %v2545 = vmax.f32 %v2520, 0.0
        %v2546 = vmax.f32 %v2521, 0.0
        %v2547 = vmax.f32 %v2522, 0.0
        %v2548 = vmax.f32 %v2523, 0.0
        %v2549 = vmax.f32 %v2524, 0.0
        %v2550 = vmax.f32 %v2525, 0.0
        %v2551 = vmax.f32 %v2526, 0.0
        %v2552 = vmax.f32 %v2527, 0.0
        %v2553 = vmax.f32 %v2528, 0.0
        %v2554 = vmax.f32 %v2529, 0.0
        %v2555 = vmax.f32 %v2530, 0.0
        %v2556 = vmax.f32 %v2531, 0.0
        %2557 = vst [vmem:[%s241] sm:$0xff] %v2532
        %2558 = vst [vmem:[%s241 + $0x8] sm:$0xff] %v2533
        %2559 = vst [vmem:[%s241 + $0x10] sm:$0xff] %v2534
        %2560 = vst [vmem:[%s241 + $0x18] sm:$0xff] %v2535
        %2561 = vst [vmem:[%s241 + $0x20] sm:$0xff] %v2536
        %2562 = vst [vmem:[%s241 + $0x28] sm:$0xff] %v2537
        %2563 = vst [vmem:[%s241 + $0x30] sm:$0xff] %v2538
        %2564 = vst [vmem:[%s241 + $0x38] sm:$0xff] %v2539
        %2565 = vst [vmem:[%s241 + $0x40] sm:$0xff] %v2540
        %2566 = vst [vmem:[%s241 + $0x48] sm:$0xff] %v2541
        %2567 = vst [vmem:[%s241 + $0x50] sm:$0xff] %v2542
        %2568 = vst [vmem:[%s241 + $0x58] sm:$0xff] %v2543
        %2569 = vst [vmem:[%s241 + $0x60] sm:$0xff] %v2544
        %2570 = vst [vmem:[%s241 + $0x68] sm:$0xff] %v2545
        %2571 = vst [vmem:[%s241 + $0x70] sm:$0xff] %v2546
        %2572 = vst [vmem:[%s241 + $0x78] sm:$0xff] %v2547
        %2573 = vst [vmem:[%s241 + $0x80] sm:$0xff] %v2548
        %2574 = vst [vmem:[%s241 + $0x88] sm:$0xff] %v2549
        %2575 = vst [vmem:[%s241 + $0x90] sm:$0xff] %v2550
        %2576 = vst [vmem:[%s241 + $0x98] sm:$0xff] %v2551
        %2577 = vst [vmem:[%s241 + $0xa0] sm:$0xff] %v2552
        %2578 = vst [vmem:[%s241 + $0xa8] sm:$0xff] %v2553
        %2579 = vst [vmem:[%s241 + $0xb0] sm:$0xff] %v2554
        %2580 = vst [vmem:[%s241 + $0xb8] sm:$0xff] %v2555
        %2581 = vst [vmem:[%s241 + $0xc0] sm:$0xff] %v2556
        %s2582 = sand.u32 %s102, 1
        %s2583 = scalar_lea.sflag [#allocation4], %s2582
        %s2584 = sand.u32 %s102, 1
        %s2585 = smul.addr %s2584, 200
        %s2586 = scalar_lea.vmem [#allocation8], %s2585
        // Predicated region
        $region45: #{tpu_custom_call.1} parent=31 // pred_check
          %p2587 = pneg %p112
        $region46: #{tpu_custom_call.1} parent=31 // pred_check_branch
          %2589 = sbr.rel (%p2587) target = $region48
        $region47: #{tpu_custom_call.1} parent=31 // pred_region
          %s2590 = smul.u32 25, %s21
          %2592 = vsyncadd %s2583, 0
          %s2593 = smul.addr %s2590, 8
          %s2594 = scalar_lea.hbm %s3, %s2593
          %s2596 = sshll.u32 %s2586, 4
          %s2597 = int_to_ptr.vmem [resolvable:$true] %s2596
          %s2598 = sshll.u32 %s2594, 4
          %s2599 = int_to_ptr.hbm [resolvable:$true] %s2598
          %2601 = dma.vmem_to_hbm [thread:$0]  %s2597, 3200, %s2599, %s2583
        $region48: #{tpu_custom_call.1} parent=31 // pred_fallthru
          _
      $region32: #{tpu_custom_call.1} parent=5 // pred_fallthru
        _
      %p2602 = scmp.le.s32.totalorder 2, %s16
      // Predicated region
      $region49: #{tpu_custom_call.1} parent=5 // pred_check
        %p2603 = pneg %p2602
      $region50: #{tpu_custom_call.1} parent=5 // pred_check_branch
        %2605 = sbr.rel (%p2603) target = $region52
      $region51: #{tpu_custom_call.1} parent=5 // pred_region
        %s2606 = ssub.s32 %s16, 2
        // Predicated region
        $region53: #{tpu_custom_call.1} parent=51 // pred_check
          %p2607 = pneg %p118
        $region54: #{tpu_custom_call.1} parent=51 // pred_check_branch
          %2609 = sbr.rel (%p2607) target = $region56
        $region55: #{tpu_custom_call.1} parent=51 // pred_region
          %s2610 = sand.u32 %s103, 1
          %s2611 = scalar_lea.sflag [#allocation4], %s2610
          %s2612 = sand.u32 %s103, 1
          %s2613 = smul.addr %s2612, 200
          %s2614 = scalar_lea.vmem [#allocation8], %s2613
          %2616 = dma.done %s2611, 3200
        $region56: #{tpu_custom_call.1} parent=51 // pred_fallthru
          _
      $region52: #{tpu_custom_call.1} parent=5 // pred_fallthru
        _
    $region6: #{tpu_custom_call.1} parent=1 // loop_footer
      %s20 = sadd.s32 1, %s16
    $region7: #{tpu_custom_call.1} parent=1 // loop_footer_branch
      %15 = sbr.rel target = $region3
    $region8: #{tpu_custom_call.1} parent=1 // loop_exit
      _
    %2617 = vsyncpa [#allocation3], 1
    %s2618 = scalar_lea.sflag [#allocation3], 1
    %2619 = vsyncpa %s2618, 1
    %2620 = vsyncpa [#allocation6], 1
    %s2621 = scalar_lea.sflag [#allocation6], 1
    %2622 = vsyncpa %s2621, 1
    %2623 = vsyncpa [#allocation4], 1
    %s2624 = scalar_lea.sflag [#allocation4], 1
    %2625 = vsyncpa %s2624, 1

</llo_original>
